<compile_context>
chip_gen: v7x
topology: tpu7x:2x2x1
jax: 0.10.0
libtpu: 0.0.40
codegen_flags: <defaults>
</compile_context>

<pallas_src>
import functools
import math

import jax
import jax.numpy as jnp
from jax.experimental import pallas as pl
from jax.experimental.pallas import tpu as pltpu


def _round_up(x, m):
    return ((x + m - 1) // m) * m


def _apply_activation(x, activation):
    if activation == 'linear':
        return x
    elif activation == 'sigmoid':
        return jax.nn.sigmoid(x)
    elif activation == 'relu':
        return jnp.maximum(x, 0.0)
    elif activation == 'rrelu':
        # TODO(synk): PyTorch rrelu uses a random negative slope in training mode; we use
        # the deterministic eval-mode mean slope (1/8 + 1/3) / 2.
        slope = (1.0 / 8.0 + 1.0 / 3.0) / 2.0
        return jnp.where(x >= 0, x, slope * x)
    elif activation == 'tanh':
        return jnp.tanh(x)
    elif activation == 'sin':
        return jnp.sin(x)
    elif activation == 'elu':
        return jnp.where(x > 0, x, jnp.expm1(x))
    elif activation == 'gelu':
        # PyTorch F.gelu default is exact (erf). The tanh approximation rides the EUP slot
        # on v6e/v7x and is cheaper if bit-parity is not required.
        return jax.nn.gelu(x, approximate=False)
    elif activation == 'silu':
        return x * jax.nn.sigmoid(x)
    else:
        raise NotImplementedError(activation)


def autoencoder_kernel(z_ref, w_ref, b_ref, out_ref, *,
                       dims, steps, activation_vec, batch, batch_tile,
                       mask_last, compute_dtype):
    # z_ref:   (TB, d_in)                 batch tile of the raw (unpadded) input
    # w_ref:   (2*steps, pad_sub, pad_lane)  packed, zero-padded weights (in, out) layout
    # b_ref:   (2*steps, 1, pad_lane)        packed, zero-padded biases
    # out_ref: (TB, d_in + d_latent)      recon in lanes [0, d_in), latent after it
    h = z_ref[...]

    # Zero garbage rows of the last (partial) batch tile so exp-like activations can't
    # produce Inf/NaN there; those rows are masked on store anyway (row-independent MLP).
    if mask_last:
        rows = jax.lax.broadcasted_iota(jnp.int32, h.shape, 0)
        valid = (pl.program_id(0) * batch_tile + rows) < batch
        h = jnp.where(valid, h, jnp.zeros_like(h))

    latent = None
    for kk in range(2 * steps):
        din, dout = dims[kk]
        # Static slices of the VMEM-resident slab: only the real K x N is fed to the MXU,
        # and no padded lane ever goes through an activation.
        w = w_ref[kk][:din, :dout]           # (din, dout)
        b = b_ref[kk][:, :dout]              # (1, dout)
        h = jnp.dot(h.astype(compute_dtype), w,
                    preferred_element_type=jnp.float32)
        h = h + b.astype(jnp.float32)
        h = _apply_activation(h, activation_vec[kk % steps])
        if kk == steps - 1:
            latent = h                        # encoder output (latent), width d_latent

    # Single lane-concatenated store: (TB, d_in + d_latent), no lane padding written.
    out_ref[...] = jnp.concatenate([h, latent], axis=-1).astype(out_ref.dtype)


def init_autoencoder_params(key, layer_vec):
    """Deterministic init mirroring nn.Linear default (uniform +-1/sqrt(fan_in)).

    Returns a flat list [enc_w0, enc_b0, ..., dec_w0, dec_b0, ...] with weights already
    transposed to (in_features, out_features) and biases shaped (out_features,).
    """
    steps = len(layer_vec) - 1
    params = []

    def linear_init(k, fan_in, fan_out):
        kw, kb = jax.random.split(k)
        bound = 1.0 / math.sqrt(fan_in)
        w = jax.random.uniform(kw, (fan_in, fan_out), jnp.float32, -bound, bound)
        b = jax.random.uniform(kb, (fan_out,), jnp.float32, -bound, bound)
        return w, b

    keys = jax.random.split(key, 2 * steps)
    for k in range(steps):                      # encoder: layer_vec[k] -> layer_vec[k+1]
        w, b = linear_init(keys[k], layer_vec[k], layer_vec[k + 1])
        params.extend([w, b])
    for k in range(steps):                      # decoder: layer_vec[s-k] -> layer_vec[s-k-1]
        w, b = linear_init(keys[steps + k], layer_vec[steps - k], layer_vec[steps - k - 1])
        params.extend([w, b])
    return params


def _layer_dims(layer_vec):
    steps = len(layer_vec) - 1
    dims = [(layer_vec[k], layer_vec[k + 1]) for k in range(steps)]
    dims += [(layer_vec[steps - k], layer_vec[steps - k - 1]) for k in range(steps)]
    return dims


def pack_params(params, dims, pad_sub, pad_lane, dtype):
    """Pack all layer weights/biases into two zero-padded slabs of a single dtype."""
    n_layers = len(dims)
    w_packed = jnp.zeros((n_layers, pad_sub, pad_lane), dtype)
    b_packed = jnp.zeros((n_layers, 1, pad_lane), dtype)
    for i, (din, dout) in enumerate(dims):
        w = params[2 * i].astype(dtype)
        b = params[2 * i + 1].astype(dtype).reshape(1, -1)
        w_packed = w_packed.at[i, :din, :dout].set(w)
        b_packed = b_packed.at[i, 0:1, :dout].set(b)
    return w_packed, b_packed


def _choose_batch_tile(batch, max_tile):
    """Adaptive batch tile: small batches get a tiny tile; large batches get >= 2 tiles
    (megacore split on v7x) capped at max_tile, always a multiple of 16 (bf16-safe)."""
    b16 = _round_up(max(batch, 1), 16)
    if b16 <= 32:
        return b16
    half = _round_up((batch + 1) // 2, 16)
    return min(max_tile, half)


def autoencoder_forward(z, params, layer_vec, activation, *,
                        max_batch_tile=1024, param_dtype=jnp.float32):
    steps = len(layer_vec) - 1
    d_in = layer_vec[0]
    d_latent = layer_vec[-1]
    activation_vec = tuple((len(layer_vec) - 2) * [activation] + ['linear'])
    dims = _layer_dims(layer_vec)
    n_layers = 2 * steps

    batch = z.shape[0]
    tb = _choose_batch_tile(batch, max_batch_tile)
    n_tiles = pl.cdiv(batch, tb)
    mask_last = (batch % tb) != 0

    max_w = max(layer_vec)
    pad_sub = _round_up(max_w, 8)            # sublane-aligned "in" dim of the slab
    pad_lane = _round_up(max_w, 128)         # lane-aligned "out" dim of the slab
    w_packed, b_packed = pack_params(params, dims, pad_sub, pad_lane, param_dtype)

    out_w = d_in + d_latent                  # combined recon+latent output, no lane padding

    kernel = functools.partial(
        autoencoder_kernel, dims=tuple(dims), steps=steps,
        activation_vec=activation_vec, batch=batch, batch_tile=tb,
        mask_last=mask_last, compute_dtype=param_dtype)

    # Advisory cost estimate (true per-layer arithmetic, not padded).
    flops = 2 * batch * sum(din * dout for din, dout in dims)
    transcendentals = 0
    if activation not in ('linear', 'relu', 'rrelu'):
        for kk, (_, dout) in enumerate(dims):
            if activation_vec[kk % steps] != 'linear':
                transcendentals += batch * dout
    bytes_accessed = int(
        z.size * z.dtype.itemsize
        + w_packed.size * w_packed.dtype.itemsize
        + b_packed.size * b_packed.dtype.itemsize
        + batch * out_w * z.dtype.itemsize)

    # VMEM footprint (BlockSpec double-buffers every operand, even constant-index ones).
    p_item = jnp.dtype(param_dtype).itemsize
    vmem_est = (2 * (w_packed.size + b_packed.size) * p_item
                + 2 * tb * d_in * z.dtype.itemsize
                + 2 * tb * out_w * z.dtype.itemsize
                + 4 * tb * pad_lane * 4)          # in-kernel f32 intermediates headroom
    compiler_kwargs = dict(dimension_semantics=("parallel",))
    if vmem_est > 14 * 2**20:                     # v5e default scoped VMEM is only 16 MiB
        compiler_kwargs["vmem_limit_bytes"] = int(min(vmem_est * 3 // 2, 64 * 2**20))

    out = pl.pallas_call(
        kernel,
        out_shape=jax.ShapeDtypeStruct((batch, out_w), z.dtype),
        grid=(n_tiles,),
        in_specs=[
            # Raw input tile: last dim is the full (unpadded) feature width -> legal.
            pl.BlockSpec((tb, d_in), lambda i: (i, 0)),
            # Constant block index => params DMA'd once, VMEM-resident across the grid.
            pl.BlockSpec((n_layers, pad_sub, pad_lane), lambda i: (0, 0, 0)),
            pl.BlockSpec((n_layers, 1, pad_lane), lambda i: (0, 0, 0)),
        ],
        out_specs=pl.BlockSpec((tb, out_w), lambda i: (i, 0)),
        compiler_params=pltpu.CompilerParams(**compiler_kwargs),
        cost_estimate=pl.CostEstimate(
            flops=int(flops),
            transcendentals=int(transcendentals),
            bytes_accessed=bytes_accessed,
        ),
    )(z, w_packed, b_packed)

    z_reconst = out[:, :d_in]
    x_latent = out[:, d_in:d_in + d_latent]
    return z_reconst, x_latent


def reference_forward(z, params, layer_vec, activation):
    """Pure-JAX reference for a sanity check."""
    steps = len(layer_vec) - 1
    activation_vec = (len(layer_vec) - 2) * [activation] + ['linear']
    h = z.astype(jnp.float32)
    for k in range(steps):
        h = h @ params[2 * k] + params[2 * k + 1]
        h = _apply_activation(h, activation_vec[k])
    latent = h
    for k in range(steps):
        h = h @ params[2 * steps + 2 * k] + params[2 * steps + 2 * k + 1]
        h = _apply_activation(h, activation_vec[k])
    return h, latent


if __name__ == "__main__":
    layer_vec = [32, 16, 8]      # input dim 32, latent dim 8
    activation = 'tanh'
    batch = 512                  # -> 2 batch tiles of 256 (grid pipelining + megacore split)

    key = jax.random.PRNGKey(0)
    k_params, k_z = jax.random.split(key)

    params = init_autoencoder_params(k_params, layer_vec)
    z = jax.random.normal(k_z, (batch, layer_vec[0]), jnp.float32)

    # --- f32 path, tile-divisible batch ---
    z_reconst, x_latent = autoencoder_forward(z, params, layer_vec, activation)
    jax.block_until_ready((z_reconst, x_latent))

    z_ref, x_ref = reference_forward(z, params, layer_vec, activation)
    assert z_reconst.shape == (batch, layer_vec[0])
    assert x_latent.shape == (batch, layer_vec[-1])
    assert jnp.allclose(z_reconst, z_ref, atol=1e-5, rtol=1e-5)
    assert jnp.allclose(x_latent, x_ref, atol=1e-5, rtol=1e-5)

    # --- tiny, non-tile-multiple batch: adaptive 16-row tile + masked partial block ---
    z_small = z[:3]
    zr_s, xl_s = autoencoder_forward(z_small, params, layer_vec, activation)
    jax.block_until_ready((zr_s, xl_s))
    zr_ref, xl_ref = reference_forward(z_small, params, layer_vec, activation)
    assert jnp.allclose(zr_s, zr_ref, atol=1e-5, rtol=1e-5)
    assert jnp.allclose(xl_s, xl_ref, atol=1e-5, rtol=1e-5)

    # --- non-divisible multi-tile batch: exercises the masked last tile with grid > 1 ---
    z_odd = z[:500]
    zr_o, xl_o = autoencoder_forward(z_odd, params, layer_vec, activation)
    jax.block_until_ready((zr_o, xl_o))
    zr_oref, xl_oref = reference_forward(z_odd, params, layer_vec, activation)
    assert jnp.allclose(zr_o, zr_oref, atol=1e-5, rtol=1e-5)
    assert jnp.allclose(xl_o, xl_oref, atol=1e-5, rtol=1e-5)

    # --- bf16 parameter/compute path (f32 accumulation); looser tolerance vs f32 reference ---
    zr_bf, xl_bf = autoencoder_forward(z, params, layer_vec, activation,
                                       param_dtype=jnp.bfloat16)
    jax.block_until_ready((zr_bf, xl_bf))
    assert jnp.allclose(zr_bf.astype(jnp.float32), z_ref, atol=5e-2, rtol=5e-2)
    assert jnp.allclose(xl_bf.astype(jnp.float32), x_ref, atol=5e-2, rtol=5e-2)

    print("KERNEL_OK")
</pallas_src>

<mosaic_0001>
module attributes {stable_mosaic.version = 11 : i64} {
  func.func @autoencoder_kernel(%arg0: i32, %arg1: memref<256x32xf32, #tpu.memory_space<vmem>>, %arg2: memref<4x32x128xf32, #tpu.memory_space<vmem>>, %arg3: memref<4x1x128xf32, #tpu.memory_space<vmem>>, %arg4: memref<256x40xf32, #tpu.memory_space<vmem>>) attributes {dimension_semantics = [#tpu.dimension_semantics<parallel>], iteration_bounds = array<i64: 2>, scalar_prefetch = 0 : i64, scratch_operands = 0 : i64, tpu.core_type = #tpu.core_type<tc>, window_params = [{transform_indices = @transform_0, window_bounds = array<i64: 256, 32>}, {pipeline_mode = #tpu.pipeline_mode<synchronous>, transform_indices = @transform_1, window_bounds = array<i64: 4, 32, 128>}, {pipeline_mode = #tpu.pipeline_mode<synchronous>, transform_indices = @transform_2, window_bounds = array<i64: 4, 1, 128>}, {transform_indices = @transform_3, window_bounds = array<i64: 256, 40>}]} {
    %c0 = arith.constant 0 : index
    %c0_0 = arith.constant 0 : index
    %0 = vector.load %arg1[%c0, %c0_0] : memref<256x32xf32, #tpu.memory_space<vmem>>, vector<256x32xf32>
    %c0_1 = arith.constant 0 : index
    %c0_2 = arith.constant 0 : index
    %c0_3 = arith.constant 0 : index
    %1 = vector.load %arg2[%c0_1, %c0_2, %c0_3] : memref<4x32x128xf32, #tpu.memory_space<vmem>>, vector<1x32x128xf32>
    %2 = vector.shape_cast %1 : vector<1x32x128xf32> to vector<32x128xf32>
    %3 = vector.extract_strided_slice %2 {offsets = [0, 0], sizes = [32, 16], strides = [1, 1]} : vector<32x128xf32> to vector<32x16xf32>
    %c0_4 = arith.constant 0 : index
    %c0_5 = arith.constant 0 : index
    %c0_6 = arith.constant 0 : index
    %4 = vector.load %arg3[%c0_4, %c0_5, %c0_6] : memref<4x1x128xf32, #tpu.memory_space<vmem>>, vector<1x1x128xf32>
    %5 = vector.shape_cast %4 : vector<1x1x128xf32> to vector<1x128xf32>
    %6 = vector.extract_strided_slice %5 {offsets = [0, 0], sizes = [1, 16], strides = [1, 1]} : vector<1x128xf32> to vector<1x16xf32>
    %cst = arith.constant dense<0.000000e+00> : vector<256x16xf32>
    %7 = tpu.matmul %0, %3, %cst {dimension_numbers = #tpu.dot_dimension_numbers<[1], [0], [0], [1], [0, 0, 1, 1], [], []>} : vector<256x32xf32>, vector<32x16xf32>, vector<256x16xf32> -> vector<256x16xf32>
    %8 = vector.broadcast %6 : vector<1x16xf32> to vector<256x16xf32>
    %9 = arith.addf %7, %8 : vector<256x16xf32>
    %10 = math.tanh %9 : vector<256x16xf32>
    %c1 = arith.constant 1 : index
    %c0_7 = arith.constant 0 : index
    %c0_8 = arith.constant 0 : index
    %11 = vector.load %arg2[%c1, %c0_7, %c0_8] : memref<4x32x128xf32, #tpu.memory_space<vmem>>, vector<1x32x128xf32>
    %12 = vector.shape_cast %11 : vector<1x32x128xf32> to vector<32x128xf32>
    %13 = vector.extract_strided_slice %12 {offsets = [0, 0], sizes = [16, 8], strides = [1, 1]} : vector<32x128xf32> to vector<16x8xf32>
    %c1_9 = arith.constant 1 : index
    %c0_10 = arith.constant 0 : index
    %c0_11 = arith.constant 0 : index
    %14 = vector.load %arg3[%c1_9, %c0_10, %c0_11] : memref<4x1x128xf32, #tpu.memory_space<vmem>>, vector<1x1x128xf32>
    %15 = vector.shape_cast %14 : vector<1x1x128xf32> to vector<1x128xf32>
    %16 = vector.extract_strided_slice %15 {offsets = [0, 0], sizes = [1, 8], strides = [1, 1]} : vector<1x128xf32> to vector<1x8xf32>
    %cst_12 = arith.constant dense<0.000000e+00> : vector<256x8xf32>
    %17 = tpu.matmul %10, %13, %cst_12 {dimension_numbers = #tpu.dot_dimension_numbers<[1], [0], [0], [1], [0, 0, 1, 1], [], []>} : vector<256x16xf32>, vector<16x8xf32>, vector<256x8xf32> -> vector<256x8xf32>
    %18 = vector.broadcast %16 : vector<1x8xf32> to vector<256x8xf32>
    %19 = arith.addf %17, %18 : vector<256x8xf32>
    %c2 = arith.constant 2 : index
    %c0_13 = arith.constant 0 : index
    %c0_14 = arith.constant 0 : index
    %20 = vector.load %arg2[%c2, %c0_13, %c0_14] : memref<4x32x128xf32, #tpu.memory_space<vmem>>, vector<1x32x128xf32>
    %21 = vector.shape_cast %20 : vector<1x32x128xf32> to vector<32x128xf32>
    %22 = vector.extract_strided_slice %21 {offsets = [0, 0], sizes = [8, 16], strides = [1, 1]} : vector<32x128xf32> to vector<8x16xf32>
    %c2_15 = arith.constant 2 : index
    %c0_16 = arith.constant 0 : index
    %c0_17 = arith.constant 0 : index
    %23 = vector.load %arg3[%c2_15, %c0_16, %c0_17] : memref<4x1x128xf32, #tpu.memory_space<vmem>>, vector<1x1x128xf32>
    %24 = vector.shape_cast %23 : vector<1x1x128xf32> to vector<1x128xf32>
    %25 = vector.extract_strided_slice %24 {offsets = [0, 0], sizes = [1, 16], strides = [1, 1]} : vector<1x128xf32> to vector<1x16xf32>
    %cst_18 = arith.constant dense<0.000000e+00> : vector<256x16xf32>
    %26 = tpu.matmul %19, %22, %cst_18 {dimension_numbers = #tpu.dot_dimension_numbers<[1], [0], [0], [1], [0, 0, 1, 1], [], []>} : vector<256x8xf32>, vector<8x16xf32>, vector<256x16xf32> -> vector<256x16xf32>
    %27 = vector.broadcast %25 : vector<1x16xf32> to vector<256x16xf32>
    %28 = arith.addf %26, %27 : vector<256x16xf32>
    %29 = math.tanh %28 : vector<256x16xf32>
    %c3 = arith.constant 3 : index
    %c0_19 = arith.constant 0 : index
    %c0_20 = arith.constant 0 : index
    %30 = vector.load %arg2[%c3, %c0_19, %c0_20] : memref<4x32x128xf32, #tpu.memory_space<vmem>>, vector<1x32x128xf32>
    %31 = vector.shape_cast %30 : vector<1x32x128xf32> to vector<32x128xf32>
    %32 = vector.extract_strided_slice %31 {offsets = [0, 0], sizes = [16, 32], strides = [1, 1]} : vector<32x128xf32> to vector<16x32xf32>
    %c3_21 = arith.constant 3 : index
    %c0_22 = arith.constant 0 : index
    %c0_23 = arith.constant 0 : index
    %33 = vector.load %arg3[%c3_21, %c0_22, %c0_23] : memref<4x1x128xf32, #tpu.memory_space<vmem>>, vector<1x1x128xf32>
    %34 = vector.shape_cast %33 : vector<1x1x128xf32> to vector<1x128xf32>
    %35 = vector.extract_strided_slice %34 {offsets = [0, 0], sizes = [1, 32], strides = [1, 1]} : vector<1x128xf32> to vector<1x32xf32>
    %cst_24 = arith.constant dense<0.000000e+00> : vector<256x32xf32>
    %36 = tpu.matmul %29, %32, %cst_24 {dimension_numbers = #tpu.dot_dimension_numbers<[1], [0], [0], [1], [0, 0, 1, 1], [], []>} : vector<256x16xf32>, vector<16x32xf32>, vector<256x32xf32> -> vector<256x32xf32>
    %37 = vector.broadcast %35 : vector<1x32xf32> to vector<256x32xf32>
    %38 = arith.addf %36, %37 : vector<256x32xf32>
    %39 = tpu.concatenate %38, %19 in 1 : vector<256x32xf32>, vector<256x8xf32> -> vector<256x40xf32>
    %c0_25 = arith.constant 0 : index
    %c0_26 = arith.constant 0 : index
    %40 = vector.load %arg4[%c0_25, %c0_26] : memref<256x40xf32, #tpu.memory_space<vmem>>, vector<256x40xf32>
    tpu.vector_store %arg4[%c0_25, %c0_26], %39 {strides = array<i32>} : memref<256x40xf32, #tpu.memory_space<vmem>>, vector<256x40xf32>,
    return
  }
  func.func @transform_0(%arg0: i32) -> (i32, i32) {
    %c0_i32 = arith.constant 0 : i32
    %c0_i32_0 = arith.constant 0 : i32
    return %arg0, %c0_i32 : i32, i32
  }
  func.func @transform_1(%arg0: i32) -> (i32, i32, i32) {
    %c0_i32 = arith.constant 0 : i32
    %c0_i32_0 = arith.constant 0 : i32
    %c0_i32_1 = arith.constant 0 : i32
    %c0_i32_2 = arith.constant 0 : i32
    return %c0_i32, %c0_i32_0, %c0_i32_1 : i32, i32, i32
  }
  func.func @transform_2(%arg0: i32) -> (i32, i32, i32) {
    %c0_i32 = arith.constant 0 : i32
    %c0_i32_0 = arith.constant 0 : i32
    %c0_i32_1 = arith.constant 0 : i32
    %c0_i32_2 = arith.constant 0 : i32
    return %c0_i32, %c0_i32_0, %c0_i32_1 : i32, i32, i32
  }
  func.func @transform_3(%arg0: i32) -> (i32, i32) {
    %c0_i32 = arith.constant 0 : i32
    %c0_i32_0 = arith.constant 0 : i32
    return %arg0, %c0_i32 : i32, i32
  }
}

</mosaic_0001>

<llo_original>
// kernel: tpu_custom_call.1
$region0: #{tpu_custom_call.1}
  #allocation0 [shape = 'u32[]', space=smem, size = 0x4, offset = 0x4, fixed_abs, tag = 'smem constant byte address 0x4 - core index']
  #allocation1 [shape = 'u32[144,128]{1,0:T(1,128)}', space=vmem, size = 0x12000, scoped, tag = 'internal scratch']
  %s0 = inlined_call_operand.vmem [shape: f32[512,32], index: 0, kind: input, shape index: {}]
  %s1 = inlined_call_operand.vmem [shape: f32[4,32,128], index: 1, kind: input, shape index: {}]
  %s2 = inlined_call_operand.vmem [shape: f32[4,1,128], index: 2, kind: input, shape index: {}]
  %s3 = inlined_call_operand.vmem [shape: f32[512,40], index: 3, kind: output, shape index: {}]
  %s4 = sld [smem:[#allocation0]]
  $region45: #{tpu_custom_call.1} parent=0
    _
  %s6 = ssub.s32 1, %s4
  %s7 = scalar_select 0, %s6, %s4
  loop: start=0, step=1, limit=4
  $region2: #{tpu_custom_call.1} parent=0 // loop_pre_header
    _
  $region3: #{tpu_custom_call.1} parent=0 // loop_header
    %s9 = sphi 0, %s13
    %p10 = scmp.ge.s32.totalorder %s9, 4
    %s19 = sphi 0, %s21
    %s22 = sphi 0, %s19
    %s23 = sphi 0, %s22
    %s39 = sphi 0, %s23
    %s43 = sphi 0, %s43
    %s45 = sphi 0, %s43
    %s46 = sphi 0, %s45
    %s60 = sphi 0, %s46
    %s64 = sphi 0, %s64
    %s66 = sphi 0, %s64
    %s67 = sphi 0, %s66
    %s81 = sphi 0, %s67
    %s87 = sphi 0, %s89
    %s90 = sphi 0, %s87
    %s91 = sphi 0, %s90
    %s107 = sphi 0, %s91
  $region4: #{tpu_custom_call.1} parent=0 // loop_header_branch
    %12 = sbr.rel (%p10) target = $region8
  $region5: #{tpu_custom_call.1} parent=0 // loop_body
    %s14 = ssub.s32 %s9, 1
    %s15 = ssub.s32 %s9, 2
    %s16 = sadd.s32 %s9, 1
    %s17 = ssub.s32 %s9, %s16
    %p18 = scmp.eq.s32.totalorder %s17, 0
    %s20 = sadd.s32 %s19, 1
    %s21 = scalar_select %p18, %s19, %s20
    %p24 = pneg %p18
    %p25 = scmp.eq.s32.totalorder %s9, 1
    %p26 = por %p24, %p25
    %p27 = scmp.ne.s32.totalorder %s19, %s22
    %p28 = scmp.eq.s32.totalorder %s9, 0
    %p29 = por %p27, %p28
    %p30 = scmp.ne.s32.totalorder %s19, %s22
    %p31 = scmp.eq.s32.totalorder %s14, 1
    %p32 = por %p30, %p31
    %p33 = scmp.ne.s32.totalorder %s22, %s23
    %p34 = scmp.eq.s32.totalorder %s14, 0
    %p35 = por %p33, %p34
    %p36 = scmp.ne.s32.totalorder %s22, %s23
    %p37 = scmp.eq.s32.totalorder %s15, 1
    %p38 = por %p36, %p37
    %p40 = scmp.ne.s32.totalorder %s23, %s39
    %p41 = scmp.eq.s32.totalorder %s15, 0
    %p42 = por %p40, %p41
    %s44 = sadd.s32 %s43, 1
    %p47 = scmp.eq.s32.totalorder %s9, 1
    %p48 = scmp.ne.s32.totalorder %s43, %s45
    %p49 = scmp.eq.s32.totalorder %s9, 0
    %p50 = por %p48, %p49
    %p51 = scmp.ne.s32.totalorder %s43, %s45
    %p52 = scmp.eq.s32.totalorder %s14, 1
    %p53 = por %p51, %p52
    %p54 = scmp.ne.s32.totalorder %s45, %s46
    %p55 = scmp.eq.s32.totalorder %s14, 0
    %p56 = por %p54, %p55
    %p57 = scmp.ne.s32.totalorder %s45, %s46
    %p58 = scmp.eq.s32.totalorder %s15, 1
    %p59 = por %p57, %p58
    %p61 = scmp.ne.s32.totalorder %s46, %s60
    %p62 = scmp.eq.s32.totalorder %s15, 0
    %p63 = por %p61, %p62
    %s65 = sadd.s32 %s64, 1
    %p68 = scmp.eq.s32.totalorder %s9, 1
    %p69 = scmp.ne.s32.totalorder %s64, %s66
    %p70 = scmp.eq.s32.totalorder %s9, 0
    %p71 = por %p69, %p70
    %p72 = scmp.ne.s32.totalorder %s64, %s66
    %p73 = scmp.eq.s32.totalorder %s14, 1
    %p74 = por %p72, %p73
    %p75 = scmp.ne.s32.totalorder %s66, %s67
    %p76 = scmp.eq.s32.totalorder %s14, 0
    %p77 = por %p75, %p76
    %p78 = scmp.ne.s32.totalorder %s66, %s67
    %p79 = scmp.eq.s32.totalorder %s15, 1
    %p80 = por %p78, %p79
    %p82 = scmp.ne.s32.totalorder %s67, %s81
    %p83 = scmp.eq.s32.totalorder %s15, 0
    %p84 = por %p82, %p83
    %s85 = ssub.s32 %s9, %s16
    %p86 = scmp.eq.s32.totalorder %s85, 0
    %s88 = sadd.s32 %s87, 1
    %s89 = scalar_select %p86, %s87, %s88
    %p92 = pneg %p86
    %p93 = scmp.eq.s32.totalorder %s9, 1
    %p94 = por %p92, %p93
    %p95 = scmp.ne.s32.totalorder %s87, %s90
    %p96 = scmp.eq.s32.totalorder %s9, 0
    %p97 = por %p95, %p96
    %p98 = scmp.ne.s32.totalorder %s87, %s90
    %p99 = scmp.eq.s32.totalorder %s14, 1
    %p100 = por %p98, %p99
    %p101 = scmp.ne.s32.totalorder %s90, %s91
    %p102 = scmp.eq.s32.totalorder %s14, 0
    %p103 = por %p101, %p102
    %p104 = scmp.ne.s32.totalorder %s90, %s91
    %p105 = scmp.eq.s32.totalorder %s15, 1
    %p106 = por %p104, %p105
    %p108 = scmp.ne.s32.totalorder %s91, %s107
    %p109 = scmp.eq.s32.totalorder %s15, 0
    %p110 = por %p108, %p109
    %p111 = scmp.le.s32.totalorder 1, %s9
    %p112 = scmp.lt.s32.totalorder %s9, 3
    %p113 = pnand %p111, %p112
    %p114 = pneg %p113
    // Predicated region
    $region9: #{tpu_custom_call.1} parent=5 // pred_check
      _
    $region10: #{tpu_custom_call.1} parent=5 // pred_check_branch
      %116 = sbr.rel (%p113) target = $region12
    $region11: #{tpu_custom_call.1} parent=5 // pred_region
      %s117 = ssub.s32 %s9, 1
      // Predicated region
      $region13: #{tpu_custom_call.1} parent=11 // pred_check
        %p118 = pneg %p56
      $region14: #{tpu_custom_call.1} parent=11 // pred_check_branch
        %120 = sbr.rel (%p118) target = $region16
      $region15: #{tpu_custom_call.1} parent=11 // pred_region
        _
      $region16: #{tpu_custom_call.1} parent=11 // pred_fallthru
        _
      // Predicated region
      $region17: #{tpu_custom_call.1} parent=11 // pred_check
        %p121 = pneg %p77
      $region18: #{tpu_custom_call.1} parent=11 // pred_check_branch
        %123 = sbr.rel (%p121) target = $region20
      $region19: #{tpu_custom_call.1} parent=11 // pred_region
        _
      $region20: #{tpu_custom_call.1} parent=11 // pred_fallthru
        _
    $region12: #{tpu_custom_call.1} parent=5 // pred_fallthru
      _
    %p124 = scmp.lt.s32.totalorder %s9, 2
    // Predicated region
    $region21: #{tpu_custom_call.1} parent=5 // pred_check
      %p125 = pneg %p124
    $region22: #{tpu_custom_call.1} parent=5 // pred_check_branch
      %127 = sbr.rel (%p125) target = $region24
    $region23: #{tpu_custom_call.1} parent=5 // pred_region
      // Predicated region
      $region25: #{tpu_custom_call.1} parent=23 // pred_check
        %p128 = pneg %p29
      $region26: #{tpu_custom_call.1} parent=23 // pred_check_branch
        %130 = sbr.rel (%p128) target = $region28
      $region27: #{tpu_custom_call.1} parent=23 // pred_region
        %s131 = smul.u32 32, %s9
        %p132 = scmp.lt.s32.totalorder %s131, 63
        %s133 = scalar_select %p132, %s131, 63
        %s134 = smul.addr %s133, 8
        %s135 = scalar_lea.vmem %s0, %s134
        %s136 = smul.u32 32, %s9
      $region28: #{tpu_custom_call.1} parent=23 // pred_fallthru
        _
    $region24: #{tpu_custom_call.1} parent=5 // pred_fallthru
      _
    %p137 = scmp.le.s32.totalorder 1, %s9
    %p138 = scmp.lt.s32.totalorder %s9, 3
    %p139 = pnand %p137, %p138
    %p140 = pneg %p139
    // Predicated region
    $region29: #{tpu_custom_call.1} parent=5 // pred_check
      _
    $region30: #{tpu_custom_call.1} parent=5 // pred_check_branch
      %142 = sbr.rel (%p139) target = $region32
    $region31: #{tpu_custom_call.1} parent=5 // pred_region
      %s143 = ssub.s32 %s9, 1
      %s144 = smul.u32 32, %s14
      %p145 = scmp.lt.s32.totalorder %s144, 63
      %s146 = scalar_select %p145, %s144, 63
      %s147 = smul.addr %s146, 8
      %s148 = scalar_lea.vmem %s0, %s147
      %p149 = pneg %p35
      %p150 = pneg %p32
      %p151 = pneg %p56
      %p152 = pneg %p53
      %p153 = pneg %p77
      %p154 = pneg %p74
      %p155 = pneg %p103
      %p156 = pneg %p100
      %s157 = smul.u32 32, %s14
      %p158 = scmp.lt.s32.totalorder %s157, 63
      %s159 = scalar_select %p158, %s157, 63
      %s160 = smul.addr %s159, 8
      %s161 = scalar_lea.vmem %s3, %s160
      %s162 = smul.u32 32, %s14
      %p163 = scmp.lt.s32.totalorder %s162, 63
      %s164 = scalar_select %p163, %s162, 63
      %s165 = smul.addr %s164, 8
      %s166 = scalar_lea.vmem %s0, %s165
      %s167 = smul.u32 32, %s14
      %s168 = smul.u32 32, %s14
      %p169 = scmp.lt.s32.totalorder %s168, 63
      %s170 = scalar_select %p169, %s168, 63
      %s171 = smul.addr %s170, 8
      %s172 = scalar_lea.vmem %s3, %s171
      %s173 = smul.u32 32, %s14
      %v174 = vld [vmem:[%s166] sm:$0xff]
      %v175 = vld [vmem:[%s166 + $0x8] sm:$0xff]
      %v176 = vld [vmem:[%s166 + $0x10] sm:$0xff]
      %v177 = vld [vmem:[%s166 + $0x18] sm:$0xff]
      %v178 = vld [vmem:[%s166 + $0x20] sm:$0xff]
      %v179 = vld [vmem:[%s166 + $0x28] sm:$0xff]
      %v180 = vld [vmem:[%s166 + $0x30] sm:$0xff]
      %v181 = vld [vmem:[%s166 + $0x38] sm:$0xff]
      %v182 = vld [vmem:[%s166 + $0x40] sm:$0xff]
      %v183 = vld [vmem:[%s166 + $0x48] sm:$0xff]
      %v184 = vld [vmem:[%s166 + $0x50] sm:$0xff]
      %v185 = vld [vmem:[%s166 + $0x58] sm:$0xff]
      %v186 = vld [vmem:[%s166 + $0x60] sm:$0xff]
      %v187 = vld [vmem:[%s166 + $0x68] sm:$0xff]
      %v188 = vld [vmem:[%s166 + $0x70] sm:$0xff]
      %v189 = vld [vmem:[%s166 + $0x78] sm:$0xff]
      %v190 = vld [vmem:[%s166 + $0x80] sm:$0xff]
      %v191 = vld [vmem:[%s166 + $0x88] sm:$0xff]
      %v192 = vld [vmem:[%s166 + $0x90] sm:$0xff]
      %v193 = vld [vmem:[%s166 + $0x98] sm:$0xff]
      %v194 = vld [vmem:[%s166 + $0xa0] sm:$0xff]
      %v195 = vld [vmem:[%s166 + $0xa8] sm:$0xff]
      %v196 = vld [vmem:[%s166 + $0xb0] sm:$0xff]
      %v197 = vld [vmem:[%s166 + $0xb8] sm:$0xff]
      %v198 = vld [vmem:[%s166 + $0xc0] sm:$0xff]
      %v199 = vld [vmem:[%s166 + $0xc8] sm:$0xff]
      %v200 = vld [vmem:[%s166 + $0xd0] sm:$0xff]
      %v201 = vld [vmem:[%s166 + $0xd8] sm:$0xff]
      %v202 = vld [vmem:[%s166 + $0xe0] sm:$0xff]
      %v203 = vld [vmem:[%s166 + $0xe8] sm:$0xff]
      %v204 = vld [vmem:[%s166 + $0xf0] sm:$0xff]
      %v205 = vld [vmem:[%s166 + $0xf8] sm:$0xff]
      %v206 = vld [vmem:[%s1] sm:$0xff]
      %v207 = vld [vmem:[%s1 + $0x8] sm:$0xff]
      %v208 = vld [vmem:[%s1 + $0x10] sm:$0xff]
      %v209 = vld [vmem:[%s1 + $0x18] sm:$0xff]
      %v210 = vld [vmem:[%s2] sm:$0x1]
      %v212 = vlaneseq
      %v213 = vshrl.u32 %v212, 7
      %v214 = vsub.s32 0, %v213
      %v215 = vrot.slane %v210, %v214
      %vm217 = vcmask 261120
      %v219 = vsel %vm217, %v174, 0
      %v222 = vsel %vm217, %v175, 0
      %v225 = vsel %vm217, %v176, 0
      %v228 = vsel %vm217, %v177, 0
      %v231 = vsel %vm217, %v178, 0
      %v234 = vsel %vm217, %v179, 0
      %v237 = vsel %vm217, %v180, 0
      %v240 = vsel %vm217, %v181, 0
      %v243 = vsel %vm217, %v182, 0
      %v246 = vsel %vm217, %v183, 0
      %v249 = vsel %vm217, %v184, 0
      %v252 = vsel %vm217, %v185, 0
      %v255 = vsel %vm217, %v186, 0
      %v258 = vsel %vm217, %v187, 0
      %v261 = vsel %vm217, %v188, 0
      %v264 = vsel %vm217, %v189, 0
      %v267 = vsel %vm217, %v190, 0
      %v270 = vsel %vm217, %v191, 0
      %v273 = vsel %vm217, %v192, 0
      %v276 = vsel %vm217, %v193, 0
      %v279 = vsel %vm217, %v194, 0
      %v282 = vsel %vm217, %v195, 0
      %v285 = vsel %vm217, %v196, 0
      %v288 = vsel %vm217, %v197, 0
      %v291 = vsel %vm217, %v198, 0
      %v294 = vsel %vm217, %v199, 0
      %v297 = vsel %vm217, %v200, 0
      %v300 = vsel %vm217, %v201, 0
      %v303 = vsel %vm217, %v202, 0
      %v306 = vsel %vm217, %v203, 0
      %v309 = vsel %vm217, %v204, 0
      %v312 = vsel %vm217, %v205, 0
      %314 = vmatprep.subr.mxu0 0.0
      %315 = vmatpush1.msra.mxu0 %v206
      %316 = vmatprep.subr.mxu0 0.0
      %317 = vmatpush1.msra.mxu0 %v207
      %318 = vmatprep.subr.mxu0 0.0
      %319 = vmatpush1.msra.mxu0 %v208
      %320 = vmatprep.subr.mxu0 0.0
      %321 = vmatpush1.msra.mxu0 %v209
      %322 = vmatprep.subr.mxu0 0.0
      %323 = vmatpush1.msra.mxu0 0.0
      %324 = vmatprep.subr.mxu0 0.0
      %325 = vmatpush1.msra.mxu0 0.0
      %326 = vmatprep.subr.mxu0 0.0
      %327 = vmatpush1.msra.mxu0 0.0
      %328 = vmatprep.subr.mxu0 0.0
      %329 = vmatpush1.msra.mxu0 0.0
      %330 = vmatprep.subr.mxu0 0.0
      %331 = vmatpush1.msra.mxu0 0.0
      %332 = vmatprep.subr.mxu0 0.0
      %333 = vmatpush1.msra.mxu0 0.0
      %334 = vmatprep.subr.mxu0 0.0
      %335 = vmatpush1.msra.mxu0 0.0
      %336 = vmatprep.subr.mxu0 0.0
      %337 = vmatpush1.msra.mxu0 0.0
      %338 = vmatprep.subr.mxu0 0.0
      %339 = vmatpush1.msra.mxu0 0.0
      %340 = vmatprep.subr.mxu0 0.0
      %341 = vmatpush1.msra.mxu0 0.0
      %342 = vmatprep.subr.mxu0 0.0
      %343 = vmatpush1.msra.mxu0 0.0
      %344 = vmatprep.subr.mxu0 0.0
      %345 = vmatpush1.msra.mxu0 0.0
      %346 = vmatprep.subr.mxu0 0.0
      %347 = vmatpush1.msra.mxu0 0.0
      %348 = vmatprep.subr.mxu0 0.0
      %349 = vmatpush1.msra.mxu0 0.0
      %350 = vmatprep.subr.mxu0 0.0
      %351 = vmatpush1.msra.mxu0 0.0
      %352 = vmatprep.subr.mxu0 0.0
      %353 = vmatpush1.msra.mxu0 0.0
      %354 = vmatprep.subr.mxu0 0.0
      %355 = vmatpush1.msra.mxu0 0.0
      %356 = vmatprep.subr.mxu0 0.0
      %357 = vmatpush1.msra.mxu0 0.0
      %358 = vmatprep.subr.mxu0 0.0
      %359 = vmatpush1.msra.mxu0 0.0
      %360 = vmatprep.subr.mxu0 0.0
      %361 = vmatpush1.msra.mxu0 0.0
      %362 = vmatprep.subr.mxu0 0.0
      %363 = vmatpush1.msra.mxu0 0.0
      %364 = vmatprep.subr.mxu0 0.0
      %365 = vmatpush1.msra.mxu0 0.0
      %366 = vmatprep.subr.mxu0 0.0
      %367 = vmatpush1.msra.mxu0 0.0
      %368 = vmatprep.subr.mxu0 0.0
      %369 = vmatpush1.msra.mxu0 0.0
      %370 = vmatprep.subr.mxu0 0.0
      %371 = vmatpush1.msra.mxu0 0.0
      %372 = vmatprep.subr.mxu0 0.0
      %373 = vmatpush1.msra.mxu0 0.0
      %374 = vmatprep.subr.mxu0 0.0
      %375 = vmatpush1.msra.mxu0 0.0
      %376 = vmatprep.subr.mxu0 0.0
      %377 = vmatpush1.msra.mxu0 0.0
      %378 = vmatprep.mubr.f32.mxu0 0.0
      %379 = vmatmul.mubr.f32.gmra.mrb[0].mxu0 %v219
      %v380 = vpop.f32.mrb[0].mxu0
      %v381 = vadd.f32 %v215, %v380
      %v382 = vpop.f32.mrb[0].mxu0
      %383 = vmatprep.mubr.f32.mxu0 0.0
      %384 = vmatmul.mubr.f32.gmra.mrb[0].mxu0 %v222
      %v385 = vpop.f32.mrb[0].mxu0
      %v386 = vadd.f32 %v215, %v385
      %v387 = vpop.f32.mrb[0].mxu0
      %388 = vmatprep.mubr.f32.mxu0 0.0
      %389 = vmatmul.mubr.f32.gmra.mrb[0].mxu0 %v225
      %v390 = vpop.f32.mrb[0].mxu0
      %v391 = vadd.f32 %v215, %v390
      %v392 = vpop.f32.mrb[0].mxu0
      %393 = vmatprep.mubr.f32.mxu0 0.0
      %394 = vmatmul.mubr.f32.gmra.mrb[0].mxu0 %v228
      %v395 = vpop.f32.mrb[0].mxu0
      %v396 = vadd.f32 %v215, %v395
      %v397 = vpop.f32.mrb[0].mxu0
      %398 = vmatprep.mubr.f32.mxu0 0.0
      %399 = vmatmul.mubr.f32.gmra.mrb[0].mxu0 %v231
      %v400 = vpop.f32.mrb[0].mxu0
      %v401 = vadd.f32 %v215, %v400
      %v402 = vpop.f32.mrb[0].mxu0
      %403 = vmatprep.mubr.f32.mxu0 0.0
      %404 = vmatmul.mubr.f32.gmra.mrb[0].mxu0 %v234
      %v405 = vpop.f32.mrb[0].mxu0
      %v406 = vadd.f32 %v215, %v405
      %v407 = vpop.f32.mrb[0].mxu0
      %408 = vmatprep.mubr.f32.mxu0 0.0
      %409 = vmatmul.mubr.f32.gmra.mrb[0].mxu0 %v237
      %v410 = vpop.f32.mrb[0].mxu0
      %v411 = vadd.f32 %v215, %v410
      %v412 = vpop.f32.mrb[0].mxu0
      %413 = vmatprep.mubr.f32.mxu0 0.0
      %414 = vmatmul.mubr.f32.gmra.mrb[0].mxu0 %v240
      %v415 = vpop.f32.mrb[0].mxu0
      %v416 = vadd.f32 %v215, %v415
      %v417 = vpop.f32.mrb[0].mxu0
      %418 = vmatprep.mubr.f32.mxu0 0.0
      %419 = vmatmul.mubr.f32.gmra.mrb[0].mxu0 %v243
      %v420 = vpop.f32.mrb[0].mxu0
      %v421 = vadd.f32 %v215, %v420
      %v422 = vpop.f32.mrb[0].mxu0
      %423 = vmatprep.mubr.f32.mxu0 0.0
      %424 = vmatmul.mubr.f32.gmra.mrb[0].mxu0 %v246
      %v425 = vpop.f32.mrb[0].mxu0
      %v426 = vadd.f32 %v215, %v425
      %v427 = vpop.f32.mrb[0].mxu0
      %428 = vmatprep.mubr.f32.mxu0 0.0
      %429 = vmatmul.mubr.f32.gmra.mrb[0].mxu0 %v249
      %v430 = vpop.f32.mrb[0].mxu0
      %v431 = vadd.f32 %v215, %v430
      %v432 = vpop.f32.mrb[0].mxu0
      %433 = vmatprep.mubr.f32.mxu0 0.0
      %434 = vmatmul.mubr.f32.gmra.mrb[0].mxu0 %v252
      %v435 = vpop.f32.mrb[0].mxu0
      %v436 = vadd.f32 %v215, %v435
      %v437 = vpop.f32.mrb[0].mxu0
      %438 = vmatprep.mubr.f32.mxu0 0.0
      %439 = vmatmul.mubr.f32.gmra.mrb[0].mxu0 %v255
      %v440 = vpop.f32.mrb[0].mxu0
      %v441 = vadd.f32 %v215, %v440
      %v442 = vpop.f32.mrb[0].mxu0
      %443 = vmatprep.mubr.f32.mxu0 0.0
      %444 = vmatmul.mubr.f32.gmra.mrb[0].mxu0 %v258
      %v445 = vpop.f32.mrb[0].mxu0
      %v446 = vadd.f32 %v215, %v445
      %v447 = vpop.f32.mrb[0].mxu0
      %448 = vmatprep.mubr.f32.mxu0 0.0
      %449 = vmatmul.mubr.f32.gmra.mrb[0].mxu0 %v261
      %v450 = vpop.f32.mrb[0].mxu0
      %v451 = vadd.f32 %v215, %v450
      %v452 = vpop.f32.mrb[0].mxu0
      %453 = vmatprep.mubr.f32.mxu0 0.0
      %454 = vmatmul.mubr.f32.gmra.mrb[0].mxu0 %v264
      %v455 = vpop.f32.mrb[0].mxu0
      %v456 = vadd.f32 %v215, %v455
      %v457 = vpop.f32.mrb[0].mxu0
      %458 = vmatprep.mubr.f32.mxu0 0.0
      %459 = vmatmul.mubr.f32.gmra.mrb[0].mxu0 %v267
      %v460 = vpop.f32.mrb[0].mxu0
      %v461 = vadd.f32 %v215, %v460
      %v462 = vpop.f32.mrb[0].mxu0
      %463 = vmatprep.mubr.f32.mxu0 0.0
      %464 = vmatmul.mubr.f32.gmra.mrb[0].mxu0 %v270
      %v465 = vpop.f32.mrb[0].mxu0
      %v466 = vadd.f32 %v215, %v465
      %v467 = vpop.f32.mrb[0].mxu0
      %468 = vmatprep.mubr.f32.mxu0 0.0
      %469 = vmatmul.mubr.f32.gmra.mrb[0].mxu0 %v273
      %v470 = vpop.f32.mrb[0].mxu0
      %v471 = vadd.f32 %v215, %v470
      %v472 = vpop.f32.mrb[0].mxu0
      %473 = vmatprep.mubr.f32.mxu0 0.0
      %474 = vmatmul.mubr.f32.gmra.mrb[0].mxu0 %v276
      %v475 = vpop.f32.mrb[0].mxu0
      %v476 = vadd.f32 %v215, %v475
      %v477 = vpop.f32.mrb[0].mxu0
      %478 = vmatprep.mubr.f32.mxu0 0.0
      %479 = vmatmul.mubr.f32.gmra.mrb[0].mxu0 %v279
      %v480 = vpop.f32.mrb[0].mxu0
      %v481 = vadd.f32 %v215, %v480
      %v482 = vpop.f32.mrb[0].mxu0
      %483 = vmatprep.mubr.f32.mxu0 0.0
      %484 = vmatmul.mubr.f32.gmra.mrb[0].mxu0 %v282
      %v485 = vpop.f32.mrb[0].mxu0
      %v486 = vadd.f32 %v215, %v485
      %v487 = vpop.f32.mrb[0].mxu0
      %488 = vmatprep.mubr.f32.mxu0 0.0
      %489 = vmatmul.mubr.f32.gmra.mrb[0].mxu0 %v285
      %v490 = vpop.f32.mrb[0].mxu0
      %v491 = vadd.f32 %v215, %v490
      %v492 = vpop.f32.mrb[0].mxu0
      %493 = vmatprep.mubr.f32.mxu0 0.0
      %494 = vmatmul.mubr.f32.gmra.mrb[0].mxu0 %v288
      %v495 = vpop.f32.mrb[0].mxu0
      %v496 = vadd.f32 %v215, %v495
      %v497 = vpop.f32.mrb[0].mxu0
      %498 = vmatprep.mubr.f32.mxu0 0.0
      %499 = vmatmul.mubr.f32.gmra.mrb[0].mxu0 %v291
      %v500 = vpop.f32.mrb[0].mxu0
      %v501 = vadd.f32 %v215, %v500
      %v502 = vpop.f32.mrb[0].mxu0
      %503 = vmatprep.mubr.f32.mxu0 0.0
      %504 = vmatmul.mubr.f32.gmra.mrb[0].mxu0 %v294
      %v505 = vpop.f32.mrb[0].mxu0
      %v506 = vadd.f32 %v215, %v505
      %v507 = vpop.f32.mrb[0].mxu0
      %508 = vmatprep.mubr.f32.mxu0 0.0
      %509 = vmatmul.mubr.f32.gmra.mrb[0].mxu0 %v297
      %v510 = vpop.f32.mrb[0].mxu0
      %v511 = vadd.f32 %v215, %v510
      %v512 = vpop.f32.mrb[0].mxu0
      %513 = vmatprep.mubr.f32.mxu0 0.0
      %514 = vmatmul.mubr.f32.gmra.mrb[0].mxu0 %v300
      %v515 = vpop.f32.mrb[0].mxu0
      %v516 = vadd.f32 %v215, %v515
      %v517 = vpop.f32.mrb[0].mxu0
      %518 = vmatprep.mubr.f32.mxu0 0.0
      %519 = vmatmul.mubr.f32.gmra.mrb[0].mxu0 %v303
      %v520 = vpop.f32.mrb[0].mxu0
      %v521 = vadd.f32 %v215, %v520
      %v522 = vpop.f32.mrb[0].mxu0
      %523 = vmatprep.mubr.f32.mxu0 0.0
      %524 = vmatmul.mubr.f32.gmra.mrb[0].mxu0 %v306
      %v525 = vpop.f32.mrb[0].mxu0
      %v526 = vadd.f32 %v215, %v525
      %v527 = vpop.f32.mrb[0].mxu0
      %528 = vmatprep.mubr.f32.mxu0 0.0
      %529 = vmatmul.mubr.f32.gmra.mrb[0].mxu0 %v309
      %v530 = vpop.f32.mrb[0].mxu0
      %v531 = vadd.f32 %v215, %v530
      %v532 = vpop.f32.mrb[0].mxu0
      %533 = vmatprep.mubr.f32.mxu0 0.0
      %534 = vmatmul.mubr.f32.gmra.mrb[0].mxu0 %v312
      %v535 = vpop.f32.mrb[0].mxu0
      %v536 = vadd.f32 %v215, %v535
      %v537 = vpop.f32.mrb[0].mxu0
      %538 = vdwg.mxu0
      %v539 = vtanh.pop %v381
      %v540 = vtanh.pop %v386
      %v541 = vtanh.pop %v391
      %v542 = vtanh.pop %v396
      %v543 = vtanh.pop %v401
      %v544 = vtanh.pop %v406
      %v545 = vtanh.pop %v411
      %v546 = vtanh.pop %v416
      %v547 = vtanh.pop %v421
      %v548 = vtanh.pop %v426
      %v549 = vtanh.pop %v431
      %v550 = vtanh.pop %v436
      %v551 = vtanh.pop %v441
      %v552 = vtanh.pop %v446
      %v553 = vtanh.pop %v451
      %v554 = vtanh.pop %v456
      %v555 = vtanh.pop %v461
      %v556 = vtanh.pop %v466
      %v557 = vtanh.pop %v471
      %v558 = vtanh.pop %v476
      %v559 = vtanh.pop %v481
      %v560 = vtanh.pop %v486
      %v561 = vtanh.pop %v491
      %v562 = vtanh.pop %v496
      %v563 = vtanh.pop %v501
      %v564 = vtanh.pop %v506
      %v565 = vtanh.pop %v511
      %v566 = vtanh.pop %v516
      %v567 = vtanh.pop %v521
      %v568 = vtanh.pop %v526
      %v569 = vtanh.pop %v531
      %v570 = vtanh.pop %v536
      %s571 = scalar_lea.vmem %s1, 32
      %v572 = vld [vmem:[%s571] sm:$0xff]
      %v573 = vld [vmem:[%s571 + $0x8] sm:$0xff]
      %s574 = scalar_lea.vmem %s2, 1
      %v575 = vld [vmem:[%s574] sm:$0x1]
      %v577 = vlaneseq
      %v578 = vshrl.u32 %v577, 7
      %v579 = vsub.s32 0, %v578
      %v580 = vrot.slane %v575, %v579
      %vm582 = vcmask 130048
      %v584 = vsel %vm582, %v539, 0
      %v587 = vsel %vm582, %v540, 0
      %v590 = vsel %vm582, %v541, 0
      %v593 = vsel %vm582, %v542, 0
      %v596 = vsel %vm582, %v543, 0
      %v599 = vsel %vm582, %v544, 0
      %v602 = vsel %vm582, %v545, 0
      %v605 = vsel %vm582, %v546, 0
      %v608 = vsel %vm582, %v547, 0
      %v611 = vsel %vm582, %v548, 0
      %v614 = vsel %vm582, %v549, 0
      %v617 = vsel %vm582, %v550, 0
      %v620 = vsel %vm582, %v551, 0
      %v623 = vsel %vm582, %v552, 0
      %v626 = vsel %vm582, %v553, 0
      %v629 = vsel %vm582, %v554, 0
      %v632 = vsel %vm582, %v555, 0
      %v635 = vsel %vm582, %v556, 0
      %v638 = vsel %vm582, %v557, 0
      %v641 = vsel %vm582, %v558, 0
      %v644 = vsel %vm582, %v559, 0
      %v647 = vsel %vm582, %v560, 0
      %v650 = vsel %vm582, %v561, 0
      %v653 = vsel %vm582, %v562, 0
      %v656 = vsel %vm582, %v563, 0
      %v659 = vsel %vm582, %v564, 0
      %v662 = vsel %vm582, %v565, 0
      %v665 = vsel %vm582, %v566, 0
      %v668 = vsel %vm582, %v567, 0
      %v671 = vsel %vm582, %v568, 0
      %v674 = vsel %vm582, %v569, 0
      %v677 = vsel %vm582, %v570, 0
      %679 = vmatprep.subr.mxu0 0.0
      %680 = vmatpush1.msra.mxu0 %v572
      %681 = vmatprep.subr.mxu0 0.0
      %682 = vmatpush1.msra.mxu0 %v573
      %683 = vmatprep.subr.mxu0 0.0
      %684 = vmatpush1.msra.mxu0 0.0
      %685 = vmatprep.subr.mxu0 0.0
      %686 = vmatpush1.msra.mxu0 0.0
      %687 = vmatprep.subr.mxu0 0.0
      %688 = vmatpush1.msra.mxu0 0.0
      %689 = vmatprep.subr.mxu0 0.0
      %690 = vmatpush1.msra.mxu0 0.0
      %691 = vmatprep.subr.mxu0 0.0
      %692 = vmatpush1.msra.mxu0 0.0
      %693 = vmatprep.subr.mxu0 0.0
      %694 = vmatpush1.msra.mxu0 0.0
      %695 = vmatprep.subr.mxu0 0.0
      %696 = vmatpush1.msra.mxu0 0.0
      %697 = vmatprep.subr.mxu0 0.0
      %698 = vmatpush1.msra.mxu0 0.0
      %699 = vmatprep.subr.mxu0 0.0
      %700 = vmatpush1.msra.mxu0 0.0
      %701 = vmatprep.subr.mxu0 0.0
      %702 = vmatpush1.msra.mxu0 0.0
      %703 = vmatprep.subr.mxu0 0.0
      %704 = vmatpush1.msra.mxu0 0.0
      %705 = vmatprep.subr.mxu0 0.0
      %706 = vmatpush1.msra.mxu0 0.0
      %707 = vmatprep.subr.mxu0 0.0
      %708 = vmatpush1.msra.mxu0 0.0
      %709 = vmatprep.subr.mxu0 0.0
      %710 = vmatpush1.msra.mxu0 0.0
      %711 = vmatprep.subr.mxu0 0.0
      %712 = vmatpush1.msra.mxu0 0.0
      %713 = vmatprep.subr.mxu0 0.0
      %714 = vmatpush1.msra.mxu0 0.0
      %715 = vmatprep.subr.mxu0 0.0
      %716 = vmatpush1.msra.mxu0 0.0
      %717 = vmatprep.subr.mxu0 0.0
      %718 = vmatpush1.msra.mxu0 0.0
      %719 = vmatprep.subr.mxu0 0.0
      %720 = vmatpush1.msra.mxu0 0.0
      %721 = vmatprep.subr.mxu0 0.0
      %722 = vmatpush1.msra.mxu0 0.0
      %723 = vmatprep.subr.mxu0 0.0
      %724 = vmatpush1.msra.mxu0 0.0
      %725 = vmatprep.subr.mxu0 0.0
      %726 = vmatpush1.msra.mxu0 0.0
      %727 = vmatprep.subr.mxu0 0.0
      %728 = vmatpush1.msra.mxu0 0.0
      %729 = vmatprep.subr.mxu0 0.0
      %730 = vmatpush1.msra.mxu0 0.0
      %731 = vmatprep.subr.mxu0 0.0
      %732 = vmatpush1.msra.mxu0 0.0
      %733 = vmatprep.subr.mxu0 0.0
      %734 = vmatpush1.msra.mxu0 0.0
      %735 = vmatprep.subr.mxu0 0.0
      %736 = vmatpush1.msra.mxu0 0.0
      %737 = vmatprep.subr.mxu0 0.0
      %738 = vmatpush1.msra.mxu0 0.0
      %739 = vmatprep.subr.mxu0 0.0
      %740 = vmatpush1.msra.mxu0 0.0
      %741 = vmatprep.subr.mxu0 0.0
      %742 = vmatpush1.msra.mxu0 0.0
      %743 = vmatprep.mubr.f32.mxu0 0.0
      %744 = vmatmul.mubr.f32.gmra.mrb[0].mxu0 %v584
      %v745 = vpop.f32.mrb[0].mxu0
      %v746 = vadd.f32 %v580, %v745
      %v747 = vpop.f32.mrb[0].mxu0
      %748 = vmatprep.mubr.f32.mxu0 0.0
      %749 = vmatmul.mubr.f32.gmra.mrb[0].mxu0 %v587
      %v750 = vpop.f32.mrb[0].mxu0
      %v751 = vadd.f32 %v580, %v750
      %v752 = vpop.f32.mrb[0].mxu0
      %753 = vmatprep.mubr.f32.mxu0 0.0
      %754 = vmatmul.mubr.f32.gmra.mrb[0].mxu0 %v590
      %v755 = vpop.f32.mrb[0].mxu0
      %v756 = vadd.f32 %v580, %v755
      %v757 = vpop.f32.mrb[0].mxu0
      %758 = vmatprep.mubr.f32.mxu0 0.0
      %759 = vmatmul.mubr.f32.gmra.mrb[0].mxu0 %v593
      %v760 = vpop.f32.mrb[0].mxu0
      %v761 = vadd.f32 %v580, %v760
      %v762 = vpop.f32.mrb[0].mxu0
      %763 = vmatprep.mubr.f32.mxu0 0.0
      %764 = vmatmul.mubr.f32.gmra.mrb[0].mxu0 %v596
      %v765 = vpop.f32.mrb[0].mxu0
      %v766 = vadd.f32 %v580, %v765
      %v767 = vpop.f32.mrb[0].mxu0
      %768 = vmatprep.mubr.f32.mxu0 0.0
      %769 = vmatmul.mubr.f32.gmra.mrb[0].mxu0 %v599
      %v770 = vpop.f32.mrb[0].mxu0
      %v771 = vadd.f32 %v580, %v770
      %v772 = vpop.f32.mrb[0].mxu0
      %773 = vmatprep.mubr.f32.mxu0 0.0
      %774 = vmatmul.mubr.f32.gmra.mrb[0].mxu0 %v602
      %v775 = vpop.f32.mrb[0].mxu0
      %v776 = vadd.f32 %v580, %v775
      %v777 = vpop.f32.mrb[0].mxu0
      %778 = vmatprep.mubr.f32.mxu0 0.0
      %779 = vmatmul.mubr.f32.gmra.mrb[0].mxu0 %v605
      %v780 = vpop.f32.mrb[0].mxu0
      %v781 = vadd.f32 %v580, %v780
      %v782 = vpop.f32.mrb[0].mxu0
      %783 = vmatprep.mubr.f32.mxu0 0.0
      %784 = vmatmul.mubr.f32.gmra.mrb[0].mxu0 %v608
      %v785 = vpop.f32.mrb[0].mxu0
      %v786 = vadd.f32 %v580, %v785
      %v787 = vpop.f32.mrb[0].mxu0
      %788 = vmatprep.mubr.f32.mxu0 0.0
      %789 = vmatmul.mubr.f32.gmra.mrb[0].mxu0 %v611
      %v790 = vpop.f32.mrb[0].mxu0
      %v791 = vadd.f32 %v580, %v790
      %v792 = vpop.f32.mrb[0].mxu0
      %793 = vmatprep.mubr.f32.mxu0 0.0
      %794 = vmatmul.mubr.f32.gmra.mrb[0].mxu0 %v614
      %v795 = vpop.f32.mrb[0].mxu0
      %v796 = vadd.f32 %v580, %v795
      %v797 = vpop.f32.mrb[0].mxu0
      %798 = vmatprep.mubr.f32.mxu0 0.0
      %799 = vmatmul.mubr.f32.gmra.mrb[0].mxu0 %v617
      %v800 = vpop.f32.mrb[0].mxu0
      %v801 = vadd.f32 %v580, %v800
      %v802 = vpop.f32.mrb[0].mxu0
      %803 = vmatprep.mubr.f32.mxu0 0.0
      %804 = vmatmul.mubr.f32.gmra.mrb[0].mxu0 %v620
      %v805 = vpop.f32.mrb[0].mxu0
      %v806 = vadd.f32 %v580, %v805
      %v807 = vpop.f32.mrb[0].mxu0
      %808 = vmatprep.mubr.f32.mxu0 0.0
      %809 = vmatmul.mubr.f32.gmra.mrb[0].mxu0 %v623
      %v810 = vpop.f32.mrb[0].mxu0
      %v811 = vadd.f32 %v580, %v810
      %v812 = vpop.f32.mrb[0].mxu0
      %813 = vmatprep.mubr.f32.mxu0 0.0
      %814 = vmatmul.mubr.f32.gmra.mrb[0].mxu0 %v626
      %v815 = vpop.f32.mrb[0].mxu0
      %v816 = vadd.f32 %v580, %v815
      %v817 = vpop.f32.mrb[0].mxu0
      %818 = vmatprep.mubr.f32.mxu0 0.0
      %819 = vmatmul.mubr.f32.gmra.mrb[0].mxu0 %v629
      %v820 = vpop.f32.mrb[0].mxu0
      %v821 = vadd.f32 %v580, %v820
      %v822 = vpop.f32.mrb[0].mxu0
      %823 = vmatprep.mubr.f32.mxu0 0.0
      %824 = vmatmul.mubr.f32.gmra.mrb[0].mxu0 %v632
      %v825 = vpop.f32.mrb[0].mxu0
      %v826 = vadd.f32 %v580, %v825
      %v827 = vpop.f32.mrb[0].mxu0
      %828 = vmatprep.mubr.f32.mxu0 0.0
      %829 = vmatmul.mubr.f32.gmra.mrb[0].mxu0 %v635
      %v830 = vpop.f32.mrb[0].mxu0
      %v831 = vadd.f32 %v580, %v830
      %v832 = vpop.f32.mrb[0].mxu0
      %833 = vmatprep.mubr.f32.mxu0 0.0
      %834 = vmatmul.mubr.f32.gmra.mrb[0].mxu0 %v638
      %v835 = vpop.f32.mrb[0].mxu0
      %v836 = vadd.f32 %v580, %v835
      %v837 = vpop.f32.mrb[0].mxu0
      %838 = vmatprep.mubr.f32.mxu0 0.0
      %839 = vmatmul.mubr.f32.gmra.mrb[0].mxu0 %v641
      %v840 = vpop.f32.mrb[0].mxu0
      %v841 = vadd.f32 %v580, %v840
      %v842 = vpop.f32.mrb[0].mxu0
      %843 = vmatprep.mubr.f32.mxu0 0.0
      %844 = vmatmul.mubr.f32.gmra.mrb[0].mxu0 %v644
      %v845 = vpop.f32.mrb[0].mxu0
      %v846 = vadd.f32 %v580, %v845
      %v847 = vpop.f32.mrb[0].mxu0
      %848 = vmatprep.mubr.f32.mxu0 0.0
      %849 = vmatmul.mubr.f32.gmra.mrb[0].mxu0 %v647
      %v850 = vpop.f32.mrb[0].mxu0
      %v851 = vadd.f32 %v580, %v850
      %v852 = vpop.f32.mrb[0].mxu0
      %853 = vmatprep.mubr.f32.mxu0 0.0
      %854 = vmatmul.mubr.f32.gmra.mrb[0].mxu0 %v650
      %v855 = vpop.f32.mrb[0].mxu0
      %v856 = vadd.f32 %v580, %v855
      %v857 = vpop.f32.mrb[0].mxu0
      %858 = vmatprep.mubr.f32.mxu0 0.0
      %859 = vmatmul.mubr.f32.gmra.mrb[0].mxu0 %v653
      %v860 = vpop.f32.mrb[0].mxu0
      %v861 = vadd.f32 %v580, %v860
      %v862 = vpop.f32.mrb[0].mxu0
      %863 = vmatprep.mubr.f32.mxu0 0.0
      %864 = vmatmul.mubr.f32.gmra.mrb[0].mxu0 %v656
      %v865 = vpop.f32.mrb[0].mxu0
      %v866 = vadd.f32 %v580, %v865
      %v867 = vpop.f32.mrb[0].mxu0
      %868 = vmatprep.mubr.f32.mxu0 0.0
      %869 = vmatmul.mubr.f32.gmra.mrb[0].mxu0 %v659
      %v870 = vpop.f32.mrb[0].mxu0
      %v871 = vadd.f32 %v580, %v870
      %v872 = vpop.f32.mrb[0].mxu0
      %873 = vmatprep.mubr.f32.mxu0 0.0
      %874 = vmatmul.mubr.f32.gmra.mrb[0].mxu0 %v662
      %v875 = vpop.f32.mrb[0].mxu0
      %v876 = vadd.f32 %v580, %v875
      %v877 = vpop.f32.mrb[0].mxu0
      %878 = vmatprep.mubr.f32.mxu0 0.0
      %879 = vmatmul.mubr.f32.gmra.mrb[0].mxu0 %v665
      %v880 = vpop.f32.mrb[0].mxu0
      %v881 = vadd.f32 %v580, %v880
      %v882 = vpop.f32.mrb[0].mxu0
      %883 = vmatprep.mubr.f32.mxu0 0.0
      %884 = vmatmul.mubr.f32.gmra.mrb[0].mxu0 %v668
      %v885 = vpop.f32.mrb[0].mxu0
      %v886 = vadd.f32 %v580, %v885
      %v887 = vpop.f32.mrb[0].mxu0
      %888 = vmatprep.mubr.f32.mxu0 0.0
      %889 = vmatmul.mubr.f32.gmra.mrb[0].mxu0 %v671
      %v890 = vpop.f32.mrb[0].mxu0
      %v891 = vadd.f32 %v580, %v890
      %v892 = vpop.f32.mrb[0].mxu0
      %893 = vmatprep.mubr.f32.mxu0 0.0
      %894 = vmatmul.mubr.f32.gmra.mrb[0].mxu0 %v674
      %v895 = vpop.f32.mrb[0].mxu0
      %v896 = vadd.f32 %v580, %v895
      %v897 = vpop.f32.mrb[0].mxu0
      %898 = vmatprep.mubr.f32.mxu0 0.0
      %899 = vmatmul.mubr.f32.gmra.mrb[0].mxu0 %v677
      %v900 = vpop.f32.mrb[0].mxu0
      %v901 = vadd.f32 %v580, %v900
      %v902 = vpop.f32.mrb[0].mxu0
      %903 = vdwg.mxu0
      %s904 = scalar_lea.vmem %s1, 64
      %v905 = vld [vmem:[%s904] sm:$0xff]
      %s906 = scalar_lea.vmem %s2, 2
      %v907 = vld [vmem:[%s906] sm:$0x1]
      %v909 = vlaneseq
      %v910 = vshrl.u32 %v909, 7
      %v911 = vsub.s32 0, %v910
      %v912 = vrot.slane %v907, %v911
      %vm914 = vcmask 64512
      %v916 = vsel %vm914, %v746, 0
      %v919 = vsel %vm914, %v751, 0
      %v922 = vsel %vm914, %v756, 0
      %v925 = vsel %vm914, %v761, 0
      %v928 = vsel %vm914, %v766, 0
      %v931 = vsel %vm914, %v771, 0
      %v934 = vsel %vm914, %v776, 0
      %v937 = vsel %vm914, %v781, 0
      %v940 = vsel %vm914, %v786, 0
      %v943 = vsel %vm914, %v791, 0
      %v946 = vsel %vm914, %v796, 0
      %v949 = vsel %vm914, %v801, 0
      %v952 = vsel %vm914, %v806, 0
      %v955 = vsel %vm914, %v811, 0
      %v958 = vsel %vm914, %v816, 0
      %v961 = vsel %vm914, %v821, 0
      %v964 = vsel %vm914, %v826, 0
      %v967 = vsel %vm914, %v831, 0
      %v970 = vsel %vm914, %v836, 0
      %v973 = vsel %vm914, %v841, 0
      %v976 = vsel %vm914, %v846, 0
      %v979 = vsel %vm914, %v851, 0
      %v982 = vsel %vm914, %v856, 0
      %v985 = vsel %vm914, %v861, 0
      %v988 = vsel %vm914, %v866, 0
      %v991 = vsel %vm914, %v871, 0
      %v994 = vsel %vm914, %v876, 0
      %v997 = vsel %vm914, %v881, 0
      %v1000 = vsel %vm914, %v886, 0
      %v1003 = vsel %vm914, %v891, 0
      %v1006 = vsel %vm914, %v896, 0
      %v1009 = vsel %vm914, %v901, 0
      %1011 = vmatprep.subr.mxu0 0.0
      %1012 = vmatpush1.msra.mxu0 %v905
      %1013 = vmatprep.subr.mxu0 0.0
      %1014 = vmatpush1.msra.mxu0 0.0
      %1015 = vmatprep.subr.mxu0 0.0
      %1016 = vmatpush1.msra.mxu0 0.0
      %1017 = vmatprep.subr.mxu0 0.0
      %1018 = vmatpush1.msra.mxu0 0.0
      %1019 = vmatprep.subr.mxu0 0.0
      %1020 = vmatpush1.msra.mxu0 0.0
      %1021 = vmatprep.subr.mxu0 0.0
      %1022 = vmatpush1.msra.mxu0 0.0
      %1023 = vmatprep.subr.mxu0 0.0
      %1024 = vmatpush1.msra.mxu0 0.0
      %1025 = vmatprep.subr.mxu0 0.0
      %1026 = vmatpush1.msra.mxu0 0.0
      %1027 = vmatprep.subr.mxu0 0.0
      %1028 = vmatpush1.msra.mxu0 0.0
      %1029 = vmatprep.subr.mxu0 0.0
      %1030 = vmatpush1.msra.mxu0 0.0
      %1031 = vmatprep.subr.mxu0 0.0
      %1032 = vmatpush1.msra.mxu0 0.0
      %1033 = vmatprep.subr.mxu0 0.0
      %1034 = vmatpush1.msra.mxu0 0.0
      %1035 = vmatprep.subr.mxu0 0.0
      %1036 = vmatpush1.msra.mxu0 0.0
      %1037 = vmatprep.subr.mxu0 0.0
      %1038 = vmatpush1.msra.mxu0 0.0
      %1039 = vmatprep.subr.mxu0 0.0
      %1040 = vmatpush1.msra.mxu0 0.0
      %1041 = vmatprep.subr.mxu0 0.0
      %1042 = vmatpush1.msra.mxu0 0.0
      %1043 = vmatprep.subr.mxu0 0.0
      %1044 = vmatpush1.msra.mxu0 0.0
      %1045 = vmatprep.subr.mxu0 0.0
      %1046 = vmatpush1.msra.mxu0 0.0
      %1047 = vmatprep.subr.mxu0 0.0
      %1048 = vmatpush1.msra.mxu0 0.0
      %1049 = vmatprep.subr.mxu0 0.0
      %1050 = vmatpush1.msra.mxu0 0.0
      %1051 = vmatprep.subr.mxu0 0.0
      %1052 = vmatpush1.msra.mxu0 0.0
      %1053 = vmatprep.subr.mxu0 0.0
      %1054 = vmatpush1.msra.mxu0 0.0
      %1055 = vmatprep.subr.mxu0 0.0
      %1056 = vmatpush1.msra.mxu0 0.0
      %1057 = vmatprep.subr.mxu0 0.0
      %1058 = vmatpush1.msra.mxu0 0.0
      %1059 = vmatprep.subr.mxu0 0.0
      %1060 = vmatpush1.msra.mxu0 0.0
      %1061 = vmatprep.subr.mxu0 0.0
      %1062 = vmatpush1.msra.mxu0 0.0
      %1063 = vmatprep.subr.mxu0 0.0
      %1064 = vmatpush1.msra.mxu0 0.0
      %1065 = vmatprep.subr.mxu0 0.0
      %1066 = vmatpush1.msra.mxu0 0.0
      %1067 = vmatprep.subr.mxu0 0.0
      %1068 = vmatpush1.msra.mxu0 0.0
      %1069 = vmatprep.subr.mxu0 0.0
      %1070 = vmatpush1.msra.mxu0 0.0
      %1071 = vmatprep.subr.mxu0 0.0
      %1072 = vmatpush1.msra.mxu0 0.0
      %1073 = vmatprep.subr.mxu0 0.0
      %1074 = vmatpush1.msra.mxu0 0.0
      %1075 = vmatprep.mubr.f32.mxu0 0.0
      %1076 = vmatmul.mubr.f32.gmra.mrb[0].mxu0 %v916
      %v1077 = vpop.f32.mrb[0].mxu0
      %v1078 = vadd.f32 %v912, %v1077
      %v1079 = vpop.f32.mrb[0].mxu0
      %1080 = vmatprep.mubr.f32.mxu0 0.0
      %1081 = vmatmul.mubr.f32.gmra.mrb[0].mxu0 %v919
      %v1082 = vpop.f32.mrb[0].mxu0
      %v1083 = vadd.f32 %v912, %v1082
      %v1084 = vpop.f32.mrb[0].mxu0
      %1085 = vmatprep.mubr.f32.mxu0 0.0
      %1086 = vmatmul.mubr.f32.gmra.mrb[0].mxu0 %v922
      %v1087 = vpop.f32.mrb[0].mxu0
      %v1088 = vadd.f32 %v912, %v1087
      %v1089 = vpop.f32.mrb[0].mxu0
      %1090 = vmatprep.mubr.f32.mxu0 0.0
      %1091 = vmatmul.mubr.f32.gmra.mrb[0].mxu0 %v925
      %v1092 = vpop.f32.mrb[0].mxu0
      %v1093 = vadd.f32 %v912, %v1092
      %v1094 = vpop.f32.mrb[0].mxu0
      %1095 = vmatprep.mubr.f32.mxu0 0.0
      %1096 = vmatmul.mubr.f32.gmra.mrb[0].mxu0 %v928
      %v1097 = vpop.f32.mrb[0].mxu0
      %v1098 = vadd.f32 %v912, %v1097
      %v1099 = vpop.f32.mrb[0].mxu0
      %1100 = vmatprep.mubr.f32.mxu0 0.0
      %1101 = vmatmul.mubr.f32.gmra.mrb[0].mxu0 %v931
      %v1102 = vpop.f32.mrb[0].mxu0
      %v1103 = vadd.f32 %v912, %v1102
      %v1104 = vpop.f32.mrb[0].mxu0
      %1105 = vmatprep.mubr.f32.mxu0 0.0
      %1106 = vmatmul.mubr.f32.gmra.mrb[0].mxu0 %v934
      %v1107 = vpop.f32.mrb[0].mxu0
      %v1108 = vadd.f32 %v912, %v1107
      %v1109 = vpop.f32.mrb[0].mxu0
      %1110 = vmatprep.mubr.f32.mxu0 0.0
      %1111 = vmatmul.mubr.f32.gmra.mrb[0].mxu0 %v937
      %v1112 = vpop.f32.mrb[0].mxu0
      %v1113 = vadd.f32 %v912, %v1112
      %v1114 = vpop.f32.mrb[0].mxu0
      %1115 = vmatprep.mubr.f32.mxu0 0.0
      %1116 = vmatmul.mubr.f32.gmra.mrb[0].mxu0 %v940
      %v1117 = vpop.f32.mrb[0].mxu0
      %v1118 = vadd.f32 %v912, %v1117
      %v1119 = vpop.f32.mrb[0].mxu0
      %1120 = vmatprep.mubr.f32.mxu0 0.0
      %1121 = vmatmul.mubr.f32.gmra.mrb[0].mxu0 %v943
      %v1122 = vpop.f32.mrb[0].mxu0
      %v1123 = vadd.f32 %v912, %v1122
      %v1124 = vpop.f32.mrb[0].mxu0
      %1125 = vmatprep.mubr.f32.mxu0 0.0
      %1126 = vmatmul.mubr.f32.gmra.mrb[0].mxu0 %v946
      %v1127 = vpop.f32.mrb[0].mxu0
      %v1128 = vadd.f32 %v912, %v1127
      %v1129 = vpop.f32.mrb[0].mxu0
      %1130 = vmatprep.mubr.f32.mxu0 0.0
      %1131 = vmatmul.mubr.f32.gmra.mrb[0].mxu0 %v949
      %v1132 = vpop.f32.mrb[0].mxu0
      %v1133 = vadd.f32 %v912, %v1132
      %v1134 = vpop.f32.mrb[0].mxu0
      %1135 = vmatprep.mubr.f32.mxu0 0.0
      %1136 = vmatmul.mubr.f32.gmra.mrb[0].mxu0 %v952
      %v1137 = vpop.f32.mrb[0].mxu0
      %v1138 = vadd.f32 %v912, %v1137
      %v1139 = vpop.f32.mrb[0].mxu0
      %1140 = vmatprep.mubr.f32.mxu0 0.0
      %1141 = vmatmul.mubr.f32.gmra.mrb[0].mxu0 %v955
      %v1142 = vpop.f32.mrb[0].mxu0
      %v1143 = vadd.f32 %v912, %v1142
      %v1144 = vpop.f32.mrb[0].mxu0
      %1145 = vmatprep.mubr.f32.mxu0 0.0
      %1146 = vmatmul.mubr.f32.gmra.mrb[0].mxu0 %v958
      %v1147 = vpop.f32.mrb[0].mxu0
      %v1148 = vadd.f32 %v912, %v1147
      %v1149 = vpop.f32.mrb[0].mxu0
      %1150 = vmatprep.mubr.f32.mxu0 0.0
      %1151 = vmatmul.mubr.f32.gmra.mrb[0].mxu0 %v961
      %v1152 = vpop.f32.mrb[0].mxu0
      %v1153 = vadd.f32 %v912, %v1152
      %v1154 = vpop.f32.mrb[0].mxu0
      %1155 = vmatprep.mubr.f32.mxu0 0.0
      %1156 = vmatmul.mubr.f32.gmra.mrb[0].mxu0 %v964
      %v1157 = vpop.f32.mrb[0].mxu0
      %v1158 = vadd.f32 %v912, %v1157
      %v1159 = vpop.f32.mrb[0].mxu0
      %1160 = vmatprep.mubr.f32.mxu0 0.0
      %1161 = vmatmul.mubr.f32.gmra.mrb[0].mxu0 %v967
      %v1162 = vpop.f32.mrb[0].mxu0
      %v1163 = vadd.f32 %v912, %v1162
      %v1164 = vpop.f32.mrb[0].mxu0
      %1165 = vmatprep.mubr.f32.mxu0 0.0
      %1166 = vmatmul.mubr.f32.gmra.mrb[0].mxu0 %v970
      %v1167 = vpop.f32.mrb[0].mxu0
      %v1168 = vadd.f32 %v912, %v1167
      %v1169 = vpop.f32.mrb[0].mxu0
      %1170 = vmatprep.mubr.f32.mxu0 0.0
      %1171 = vmatmul.mubr.f32.gmra.mrb[0].mxu0 %v973
      %v1172 = vpop.f32.mrb[0].mxu0
      %v1173 = vadd.f32 %v912, %v1172
      %v1174 = vpop.f32.mrb[0].mxu0
      %1175 = vmatprep.mubr.f32.mxu0 0.0
      %1176 = vmatmul.mubr.f32.gmra.mrb[0].mxu0 %v976
      %v1177 = vpop.f32.mrb[0].mxu0
      %v1178 = vadd.f32 %v912, %v1177
      %v1179 = vpop.f32.mrb[0].mxu0
      %1180 = vmatprep.mubr.f32.mxu0 0.0
      %1181 = vmatmul.mubr.f32.gmra.mrb[0].mxu0 %v979
      %v1182 = vpop.f32.mrb[0].mxu0
      %v1183 = vadd.f32 %v912, %v1182
      %v1184 = vpop.f32.mrb[0].mxu0
      %1185 = vmatprep.mubr.f32.mxu0 0.0
      %1186 = vmatmul.mubr.f32.gmra.mrb[0].mxu0 %v982
      %v1187 = vpop.f32.mrb[0].mxu0
      %v1188 = vadd.f32 %v912, %v1187
      %v1189 = vpop.f32.mrb[0].mxu0
      %1190 = vmatprep.mubr.f32.mxu0 0.0
      %1191 = vmatmul.mubr.f32.gmra.mrb[0].mxu0 %v985
      %v1192 = vpop.f32.mrb[0].mxu0
      %v1193 = vadd.f32 %v912, %v1192
      %v1194 = vpop.f32.mrb[0].mxu0
      %1195 = vmatprep.mubr.f32.mxu0 0.0
      %1196 = vmatmul.mubr.f32.gmra.mrb[0].mxu0 %v988
      %v1197 = vpop.f32.mrb[0].mxu0
      %v1198 = vadd.f32 %v912, %v1197
      %v1199 = vpop.f32.mrb[0].mxu0
      %1200 = vmatprep.mubr.f32.mxu0 0.0
      %1201 = vmatmul.mubr.f32.gmra.mrb[0].mxu0 %v991
      %v1202 = vpop.f32.mrb[0].mxu0
      %v1203 = vadd.f32 %v912, %v1202
      %v1204 = vpop.f32.mrb[0].mxu0
      %1205 = vmatprep.mubr.f32.mxu0 0.0
      %1206 = vmatmul.mubr.f32.gmra.mrb[0].mxu0 %v994
      %v1207 = vpop.f32.mrb[0].mxu0
      %v1208 = vadd.f32 %v912, %v1207
      %v1209 = vpop.f32.mrb[0].mxu0
      %1210 = vmatprep.mubr.f32.mxu0 0.0
      %1211 = vmatmul.mubr.f32.gmra.mrb[0].mxu0 %v997
      %v1212 = vpop.f32.mrb[0].mxu0
      %v1213 = vadd.f32 %v912, %v1212
      %v1214 = vpop.f32.mrb[0].mxu0
      %1215 = vmatprep.mubr.f32.mxu0 0.0
      %1216 = vmatmul.mubr.f32.gmra.mrb[0].mxu0 %v1000
      %v1217 = vpop.f32.mrb[0].mxu0
      %v1218 = vadd.f32 %v912, %v1217
      %v1219 = vpop.f32.mrb[0].mxu0
      %1220 = vmatprep.mubr.f32.mxu0 0.0
      %1221 = vmatmul.mubr.f32.gmra.mrb[0].mxu0 %v1003
      %v1222 = vpop.f32.mrb[0].mxu0
      %v1223 = vadd.f32 %v912, %v1222
      %v1224 = vpop.f32.mrb[0].mxu0
      %1225 = vmatprep.mubr.f32.mxu0 0.0
      %1226 = vmatmul.mubr.f32.gmra.mrb[0].mxu0 %v1006
      %v1227 = vpop.f32.mrb[0].mxu0
      %v1228 = vadd.f32 %v912, %v1227
      %v1229 = vpop.f32.mrb[0].mxu0
      %1230 = vmatprep.mubr.f32.mxu0 0.0
      %1231 = vmatmul.mubr.f32.gmra.mrb[0].mxu0 %v1009
      %v1232 = vpop.f32.mrb[0].mxu0
      %v1233 = vadd.f32 %v912, %v1232
      %v1234 = vpop.f32.mrb[0].mxu0
      %1235 = vdwg.mxu0
      %v1236 = vtanh.pop %v1078
      %v1237 = vtanh.pop %v1083
      %v1238 = vtanh.pop %v1088
      %v1239 = vtanh.pop %v1093
      %v1240 = vtanh.pop %v1098
      %v1241 = vtanh.pop %v1103
      %v1242 = vtanh.pop %v1108
      %v1243 = vtanh.pop %v1113
      %v1244 = vtanh.pop %v1118
      %v1245 = vtanh.pop %v1123
      %v1246 = vtanh.pop %v1128
      %v1247 = vtanh.pop %v1133
      %v1248 = vtanh.pop %v1138
      %v1249 = vtanh.pop %v1143
      %v1250 = vtanh.pop %v1148
      %v1251 = vtanh.pop %v1153
      %v1252 = vtanh.pop %v1158
      %v1253 = vtanh.pop %v1163
      %v1254 = vtanh.pop %v1168
      %v1255 = vtanh.pop %v1173
      %v1256 = vtanh.pop %v1178
      %v1257 = vtanh.pop %v1183
      %v1258 = vtanh.pop %v1188
      %v1259 = vtanh.pop %v1193
      %v1260 = vtanh.pop %v1198
      %v1261 = vtanh.pop %v1203
      %v1262 = vtanh.pop %v1208
      %v1263 = vtanh.pop %v1213
      %v1264 = vtanh.pop %v1218
      %v1265 = vtanh.pop %v1223
      %v1266 = vtanh.pop %v1228
      %v1267 = vtanh.pop %v1233
      %s1268 = scalar_lea.vmem %s1, 96
      %v1269 = vld [vmem:[%s1268] sm:$0xff]
      %v1270 = vld [vmem:[%s1268 + $0x8] sm:$0xff]
      %s1271 = scalar_lea.vmem %s2, 3
      %v1272 = vld [vmem:[%s1271] sm:$0x1]
      %v1274 = vlaneseq
      %v1275 = vshrl.u32 %v1274, 7
      %v1276 = vsub.s32 0, %v1275
      %v1277 = vrot.slane %v1272, %v1276
      %v1280 = vsel %vm582, %v1236, 0
      %v1283 = vsel %vm582, %v1237, 0
      %v1286 = vsel %vm582, %v1238, 0
      %v1289 = vsel %vm582, %v1239, 0
      %v1292 = vsel %vm582, %v1240, 0
      %v1295 = vsel %vm582, %v1241, 0
      %v1298 = vsel %vm582, %v1242, 0
      %v1301 = vsel %vm582, %v1243, 0
      %v1304 = vsel %vm582, %v1244, 0
      %v1307 = vsel %vm582, %v1245, 0
      %v1310 = vsel %vm582, %v1246, 0
      %v1313 = vsel %vm582, %v1247, 0
      %v1316 = vsel %vm582, %v1248, 0
      %v1319 = vsel %vm582, %v1249, 0
      %v1322 = vsel %vm582, %v1250, 0
      %v1325 = vsel %vm582, %v1251, 0
      %v1328 = vsel %vm582, %v1252, 0
      %v1331 = vsel %vm582, %v1253, 0
      %v1334 = vsel %vm582, %v1254, 0
      %v1337 = vsel %vm582, %v1255, 0
      %v1340 = vsel %vm582, %v1256, 0
      %v1343 = vsel %vm582, %v1257, 0
      %v1346 = vsel %vm582, %v1258, 0
      %v1349 = vsel %vm582, %v1259, 0
      %v1352 = vsel %vm582, %v1260, 0
      %v1355 = vsel %vm582, %v1261, 0
      %v1358 = vsel %vm582, %v1262, 0
      %v1361 = vsel %vm582, %v1263, 0
      %v1364 = vsel %vm582, %v1264, 0
      %v1367 = vsel %vm582, %v1265, 0
      %v1370 = vsel %vm582, %v1266, 0
      %v1373 = vsel %vm582, %v1267, 0
      %1375 = vmatprep.subr.mxu0 0.0
      %1376 = vmatpush1.msra.mxu0 %v1269
      %1377 = vmatprep.subr.mxu0 0.0
      %1378 = vmatpush1.msra.mxu0 %v1270
      %1379 = vmatprep.subr.mxu0 0.0
      %1380 = vmatpush1.msra.mxu0 0.0
      %1381 = vmatprep.subr.mxu0 0.0
      %1382 = vmatpush1.msra.mxu0 0.0
      %1383 = vmatprep.subr.mxu0 0.0
      %1384 = vmatpush1.msra.mxu0 0.0
      %1385 = vmatprep.subr.mxu0 0.0
      %1386 = vmatpush1.msra.mxu0 0.0
      %1387 = vmatprep.subr.mxu0 0.0
      %1388 = vmatpush1.msra.mxu0 0.0
      %1389 = vmatprep.subr.mxu0 0.0
      %1390 = vmatpush1.msra.mxu0 0.0
      %1391 = vmatprep.subr.mxu0 0.0
      %1392 = vmatpush1.msra.mxu0 0.0
      %1393 = vmatprep.subr.mxu0 0.0
      %1394 = vmatpush1.msra.mxu0 0.0
      %1395 = vmatprep.subr.mxu0 0.0
      %1396 = vmatpush1.msra.mxu0 0.0
      %1397 = vmatprep.subr.mxu0 0.0
      %1398 = vmatpush1.msra.mxu0 0.0
      %1399 = vmatprep.subr.mxu0 0.0
      %1400 = vmatpush1.msra.mxu0 0.0
      %1401 = vmatprep.subr.mxu0 0.0
      %1402 = vmatpush1.msra.mxu0 0.0
      %1403 = vmatprep.subr.mxu0 0.0
      %1404 = vmatpush1.msra.mxu0 0.0
      %1405 = vmatprep.subr.mxu0 0.0
      %1406 = vmatpush1.msra.mxu0 0.0
      %1407 = vmatprep.subr.mxu0 0.0
      %1408 = vmatpush1.msra.mxu0 0.0
      %1409 = vmatprep.subr.mxu0 0.0
      %1410 = vmatpush1.msra.mxu0 0.0
      %1411 = vmatprep.subr.mxu0 0.0
      %1412 = vmatpush1.msra.mxu0 0.0
      %1413 = vmatprep.subr.mxu0 0.0
      %1414 = vmatpush1.msra.mxu0 0.0
      %1415 = vmatprep.subr.mxu0 0.0
      %1416 = vmatpush1.msra.mxu0 0.0
      %1417 = vmatprep.subr.mxu0 0.0
      %1418 = vmatpush1.msra.mxu0 0.0
      %1419 = vmatprep.subr.mxu0 0.0
      %1420 = vmatpush1.msra.mxu0 0.0
      %1421 = vmatprep.subr.mxu0 0.0
      %1422 = vmatpush1.msra.mxu0 0.0
      %1423 = vmatprep.subr.mxu0 0.0
      %1424 = vmatpush1.msra.mxu0 0.0
      %1425 = vmatprep.subr.mxu0 0.0
      %1426 = vmatpush1.msra.mxu0 0.0
      %1427 = vmatprep.subr.mxu0 0.0
      %1428 = vmatpush1.msra.mxu0 0.0
      %1429 = vmatprep.subr.mxu0 0.0
      %1430 = vmatpush1.msra.mxu0 0.0
      %1431 = vmatprep.subr.mxu0 0.0
      %1432 = vmatpush1.msra.mxu0 0.0
      %1433 = vmatprep.subr.mxu0 0.0
      %1434 = vmatpush1.msra.mxu0 0.0
      %1435 = vmatprep.subr.mxu0 0.0
      %1436 = vmatpush1.msra.mxu0 0.0
      %1437 = vmatprep.subr.mxu0 0.0
      %1438 = vmatpush1.msra.mxu0 0.0
      %1439 = vmatprep.mubr.f32.mxu0 0.0
      %1440 = vmatmul.mubr.f32.gmra.mrb[0].mxu0 %v1280
      %v1441 = vpop.f32.mrb[0].mxu0
      %v1442 = vadd.f32 %v1277, %v1441
      %v1443 = vpop.f32.mrb[0].mxu0
      %1444 = vmatprep.mubr.f32.mxu0 0.0
      %1445 = vmatmul.mubr.f32.gmra.mrb[0].mxu0 %v1283
      %v1446 = vpop.f32.mrb[0].mxu0
      %v1447 = vadd.f32 %v1277, %v1446
      %v1448 = vpop.f32.mrb[0].mxu0
      %1449 = vmatprep.mubr.f32.mxu0 0.0
      %1450 = vmatmul.mubr.f32.gmra.mrb[0].mxu0 %v1286
      %v1451 = vpop.f32.mrb[0].mxu0
      %v1452 = vadd.f32 %v1277, %v1451
      %v1453 = vpop.f32.mrb[0].mxu0
      %1454 = vmatprep.mubr.f32.mxu0 0.0
      %1455 = vmatmul.mubr.f32.gmra.mrb[0].mxu0 %v1289
      %v1456 = vpop.f32.mrb[0].mxu0
      %v1457 = vadd.f32 %v1277, %v1456
      %v1458 = vpop.f32.mrb[0].mxu0
      %1459 = vmatprep.mubr.f32.mxu0 0.0
      %1460 = vmatmul.mubr.f32.gmra.mrb[0].mxu0 %v1292
      %v1461 = vpop.f32.mrb[0].mxu0
      %v1462 = vadd.f32 %v1277, %v1461
      %v1463 = vpop.f32.mrb[0].mxu0
      %1464 = vmatprep.mubr.f32.mxu0 0.0
      %1465 = vmatmul.mubr.f32.gmra.mrb[0].mxu0 %v1295
      %v1466 = vpop.f32.mrb[0].mxu0
      %v1467 = vadd.f32 %v1277, %v1466
      %v1468 = vpop.f32.mrb[0].mxu0
      %1469 = vmatprep.mubr.f32.mxu0 0.0
      %1470 = vmatmul.mubr.f32.gmra.mrb[0].mxu0 %v1298
      %v1471 = vpop.f32.mrb[0].mxu0
      %v1472 = vadd.f32 %v1277, %v1471
      %v1473 = vpop.f32.mrb[0].mxu0
      %1474 = vmatprep.mubr.f32.mxu0 0.0
      %1475 = vmatmul.mubr.f32.gmra.mrb[0].mxu0 %v1301
      %v1476 = vpop.f32.mrb[0].mxu0
      %v1477 = vadd.f32 %v1277, %v1476
      %v1478 = vpop.f32.mrb[0].mxu0
      %1479 = vmatprep.mubr.f32.mxu0 0.0
      %1480 = vmatmul.mubr.f32.gmra.mrb[0].mxu0 %v1304
      %v1481 = vpop.f32.mrb[0].mxu0
      %v1482 = vadd.f32 %v1277, %v1481
      %v1483 = vpop.f32.mrb[0].mxu0
      %1484 = vmatprep.mubr.f32.mxu0 0.0
      %1485 = vmatmul.mubr.f32.gmra.mrb[0].mxu0 %v1307
      %v1486 = vpop.f32.mrb[0].mxu0
      %v1487 = vadd.f32 %v1277, %v1486
      %v1488 = vpop.f32.mrb[0].mxu0
      %1489 = vmatprep.mubr.f32.mxu0 0.0
      %1490 = vmatmul.mubr.f32.gmra.mrb[0].mxu0 %v1310
      %v1491 = vpop.f32.mrb[0].mxu0
      %v1492 = vadd.f32 %v1277, %v1491
      %v1493 = vpop.f32.mrb[0].mxu0
      %1494 = vmatprep.mubr.f32.mxu0 0.0
      %1495 = vmatmul.mubr.f32.gmra.mrb[0].mxu0 %v1313
      %v1496 = vpop.f32.mrb[0].mxu0
      %v1497 = vadd.f32 %v1277, %v1496
      %v1498 = vpop.f32.mrb[0].mxu0
      %1499 = vmatprep.mubr.f32.mxu0 0.0
      %1500 = vmatmul.mubr.f32.gmra.mrb[0].mxu0 %v1316
      %v1501 = vpop.f32.mrb[0].mxu0
      %v1502 = vadd.f32 %v1277, %v1501
      %v1503 = vpop.f32.mrb[0].mxu0
      %1504 = vmatprep.mubr.f32.mxu0 0.0
      %1505 = vmatmul.mubr.f32.gmra.mrb[0].mxu0 %v1319
      %v1506 = vpop.f32.mrb[0].mxu0
      %v1507 = vadd.f32 %v1277, %v1506
      %v1508 = vpop.f32.mrb[0].mxu0
      %1509 = vmatprep.mubr.f32.mxu0 0.0
      %1510 = vmatmul.mubr.f32.gmra.mrb[0].mxu0 %v1322
      %v1511 = vpop.f32.mrb[0].mxu0
      %v1512 = vadd.f32 %v1277, %v1511
      %v1513 = vpop.f32.mrb[0].mxu0
      %1514 = vmatprep.mubr.f32.mxu0 0.0
      %1515 = vmatmul.mubr.f32.gmra.mrb[0].mxu0 %v1325
      %v1516 = vpop.f32.mrb[0].mxu0
      %v1517 = vadd.f32 %v1277, %v1516
      %v1518 = vpop.f32.mrb[0].mxu0
      %1519 = vmatprep.mubr.f32.mxu0 0.0
      %1520 = vmatmul.mubr.f32.gmra.mrb[0].mxu0 %v1328
      %v1521 = vpop.f32.mrb[0].mxu0
      %v1522 = vadd.f32 %v1277, %v1521
      %v1523 = vpop.f32.mrb[0].mxu0
      %1524 = vmatprep.mubr.f32.mxu0 0.0
      %1525 = vmatmul.mubr.f32.gmra.mrb[0].mxu0 %v1331
      %v1526 = vpop.f32.mrb[0].mxu0
      %v1527 = vadd.f32 %v1277, %v1526
      %v1528 = vpop.f32.mrb[0].mxu0
      %1529 = vmatprep.mubr.f32.mxu0 0.0
      %1530 = vmatmul.mubr.f32.gmra.mrb[0].mxu0 %v1334
      %v1531 = vpop.f32.mrb[0].mxu0
      %v1532 = vadd.f32 %v1277, %v1531
      %v1533 = vpop.f32.mrb[0].mxu0
      %1534 = vmatprep.mubr.f32.mxu0 0.0
      %1535 = vmatmul.mubr.f32.gmra.mrb[0].mxu0 %v1337
      %v1536 = vpop.f32.mrb[0].mxu0
      %v1537 = vadd.f32 %v1277, %v1536
      %v1538 = vpop.f32.mrb[0].mxu0
      %1539 = vmatprep.mubr.f32.mxu0 0.0
      %1540 = vmatmul.mubr.f32.gmra.mrb[0].mxu0 %v1340
      %v1541 = vpop.f32.mrb[0].mxu0
      %v1542 = vadd.f32 %v1277, %v1541
      %v1543 = vpop.f32.mrb[0].mxu0
      %1544 = vmatprep.mubr.f32.mxu0 0.0
      %1545 = vmatmul.mubr.f32.gmra.mrb[0].mxu0 %v1343
      %v1546 = vpop.f32.mrb[0].mxu0
      %v1547 = vadd.f32 %v1277, %v1546
      %v1548 = vpop.f32.mrb[0].mxu0
      %1549 = vmatprep.mubr.f32.mxu0 0.0
      %1550 = vmatmul.mubr.f32.gmra.mrb[0].mxu0 %v1346
      %v1551 = vpop.f32.mrb[0].mxu0
      %v1552 = vadd.f32 %v1277, %v1551
      %v1553 = vpop.f32.mrb[0].mxu0
      %1554 = vmatprep.mubr.f32.mxu0 0.0
      %1555 = vmatmul.mubr.f32.gmra.mrb[0].mxu0 %v1349
      %v1556 = vpop.f32.mrb[0].mxu0
      %v1557 = vadd.f32 %v1277, %v1556
      %v1558 = vpop.f32.mrb[0].mxu0
      %1559 = vmatprep.mubr.f32.mxu0 0.0
      %1560 = vmatmul.mubr.f32.gmra.mrb[0].mxu0 %v1352
      %v1561 = vpop.f32.mrb[0].mxu0
      %v1562 = vadd.f32 %v1277, %v1561
      %v1563 = vpop.f32.mrb[0].mxu0
      %1564 = vmatprep.mubr.f32.mxu0 0.0
      %1565 = vmatmul.mubr.f32.gmra.mrb[0].mxu0 %v1355
      %v1566 = vpop.f32.mrb[0].mxu0
      %v1567 = vadd.f32 %v1277, %v1566
      %v1568 = vpop.f32.mrb[0].mxu0
      %1569 = vmatprep.mubr.f32.mxu0 0.0
      %1570 = vmatmul.mubr.f32.gmra.mrb[0].mxu0 %v1358
      %v1571 = vpop.f32.mrb[0].mxu0
      %v1572 = vadd.f32 %v1277, %v1571
      %v1573 = vpop.f32.mrb[0].mxu0
      %1574 = vmatprep.mubr.f32.mxu0 0.0
      %1575 = vmatmul.mubr.f32.gmra.mrb[0].mxu0 %v1361
      %v1576 = vpop.f32.mrb[0].mxu0
      %v1577 = vadd.f32 %v1277, %v1576
      %v1578 = vpop.f32.mrb[0].mxu0
      %1579 = vmatprep.mubr.f32.mxu0 0.0
      %1580 = vmatmul.mubr.f32.gmra.mrb[0].mxu0 %v1364
      %v1581 = vpop.f32.mrb[0].mxu0
      %v1582 = vadd.f32 %v1277, %v1581
      %v1583 = vpop.f32.mrb[0].mxu0
      %1584 = vmatprep.mubr.f32.mxu0 0.0
      %1585 = vmatmul.mubr.f32.gmra.mrb[0].mxu0 %v1367
      %v1586 = vpop.f32.mrb[0].mxu0
      %v1587 = vadd.f32 %v1277, %v1586
      %v1588 = vpop.f32.mrb[0].mxu0
      %1589 = vmatprep.mubr.f32.mxu0 0.0
      %1590 = vmatmul.mubr.f32.gmra.mrb[0].mxu0 %v1370
      %v1591 = vpop.f32.mrb[0].mxu0
      %v1592 = vadd.f32 %v1277, %v1591
      %v1593 = vpop.f32.mrb[0].mxu0
      %1594 = vmatprep.mubr.f32.mxu0 0.0
      %1595 = vmatmul.mubr.f32.gmra.mrb[0].mxu0 %v1373
      %v1596 = vpop.f32.mrb[0].mxu0
      %v1597 = vadd.f32 %v1277, %v1596
      %v1598 = vpop.f32.mrb[0].mxu0
      %1599 = vdwg.mxu0
      %1600 = vrot.lane.b32.xlu0 %v746, 32
      %v1601 = vpop.permute.xlu0 %1600
      %1602 = vrot.lane.b32.xlu0 %v751, 32
      %v1603 = vpop.permute.xlu0 %1602
      %1604 = vrot.lane.b32.xlu0 %v756, 32
      %v1605 = vpop.permute.xlu0 %1604
      %1606 = vrot.lane.b32.xlu0 %v761, 32
      %v1607 = vpop.permute.xlu0 %1606
      %1608 = vrot.lane.b32.xlu0 %v766, 32
      %v1609 = vpop.permute.xlu0 %1608
      %1610 = vrot.lane.b32.xlu0 %v771, 32
      %v1611 = vpop.permute.xlu0 %1610
      %1612 = vrot.lane.b32.xlu0 %v776, 32
      %v1613 = vpop.permute.xlu0 %1612
      %1614 = vrot.lane.b32.xlu0 %v781, 32
      %v1615 = vpop.permute.xlu0 %1614
      %1616 = vrot.lane.b32.xlu0 %v786, 32
      %v1617 = vpop.permute.xlu0 %1616
      %1618 = vrot.lane.b32.xlu0 %v791, 32
      %v1619 = vpop.permute.xlu0 %1618
      %1620 = vrot.lane.b32.xlu0 %v796, 32
      %v1621 = vpop.permute.xlu0 %1620
      %1622 = vrot.lane.b32.xlu0 %v801, 32
      %v1623 = vpop.permute.xlu0 %1622
      %1624 = vrot.lane.b32.xlu0 %v806, 32
      %v1625 = vpop.permute.xlu0 %1624
      %1626 = vrot.lane.b32.xlu0 %v811, 32
      %v1627 = vpop.permute.xlu0 %1626
      %1628 = vrot.lane.b32.xlu0 %v816, 32
      %v1629 = vpop.permute.xlu0 %1628
      %1630 = vrot.lane.b32.xlu0 %v821, 32
      %v1631 = vpop.permute.xlu0 %1630
      %1632 = vrot.lane.b32.xlu0 %v826, 32
      %v1633 = vpop.permute.xlu0 %1632
      %1634 = vrot.lane.b32.xlu0 %v831, 32
      %v1635 = vpop.permute.xlu0 %1634
      %1636 = vrot.lane.b32.xlu0 %v836, 32
      %v1637 = vpop.permute.xlu0 %1636
      %1638 = vrot.lane.b32.xlu0 %v841, 32
      %v1639 = vpop.permute.xlu0 %1638
      %1640 = vrot.lane.b32.xlu0 %v846, 32
      %v1641 = vpop.permute.xlu0 %1640
      %1642 = vrot.lane.b32.xlu0 %v851, 32
      %v1643 = vpop.permute.xlu0 %1642
      %1644 = vrot.lane.b32.xlu0 %v856, 32
      %v1645 = vpop.permute.xlu0 %1644
      %1646 = vrot.lane.b32.xlu0 %v861, 32
      %v1647 = vpop.permute.xlu0 %1646
      %1648 = vrot.lane.b32.xlu0 %v866, 32
      %v1649 = vpop.permute.xlu0 %1648
      %1650 = vrot.lane.b32.xlu0 %v871, 32
      %v1651 = vpop.permute.xlu0 %1650
      %1652 = vrot.lane.b32.xlu0 %v876, 32
      %v1653 = vpop.permute.xlu0 %1652
      %1654 = vrot.lane.b32.xlu0 %v881, 32
      %v1655 = vpop.permute.xlu0 %1654
      %1656 = vrot.lane.b32.xlu0 %v886, 32
      %v1657 = vpop.permute.xlu0 %1656
      %1658 = vrot.lane.b32.xlu0 %v891, 32
      %v1659 = vpop.permute.xlu0 %1658
      %1660 = vrot.lane.b32.xlu0 %v896, 32
      %v1661 = vpop.permute.xlu0 %1660
      %1662 = vrot.lane.b32.xlu0 %v901, 32
      %v1663 = vpop.permute.xlu0 %1662
      %v1696 = vsel %vm217, %v1442, %v1601
      %v1697 = vsel %vm217, %v1447, %v1603
      %v1698 = vsel %vm217, %v1452, %v1605
      %v1699 = vsel %vm217, %v1457, %v1607
      %v1700 = vsel %vm217, %v1462, %v1609
      %v1701 = vsel %vm217, %v1467, %v1611
      %v1702 = vsel %vm217, %v1472, %v1613
      %v1703 = vsel %vm217, %v1477, %v1615
      %v1704 = vsel %vm217, %v1482, %v1617
      %v1705 = vsel %vm217, %v1487, %v1619
      %v1706 = vsel %vm217, %v1492, %v1621
      %v1707 = vsel %vm217, %v1497, %v1623
      %v1708 = vsel %vm217, %v1502, %v1625
      %v1709 = vsel %vm217, %v1507, %v1627
      %v1710 = vsel %vm217, %v1512, %v1629
      %v1711 = vsel %vm217, %v1517, %v1631
      %v1712 = vsel %vm217, %v1522, %v1633
      %v1713 = vsel %vm217, %v1527, %v1635
      %v1714 = vsel %vm217, %v1532, %v1637
      %v1715 = vsel %vm217, %v1537, %v1639
      %v1716 = vsel %vm217, %v1542, %v1641
      %v1717 = vsel %vm217, %v1547, %v1643
      %v1718 = vsel %vm217, %v1552, %v1645
      %v1719 = vsel %vm217, %v1557, %v1647
      %v1720 = vsel %vm217, %v1562, %v1649
      %v1721 = vsel %vm217, %v1567, %v1651
      %v1722 = vsel %vm217, %v1572, %v1653
      %v1723 = vsel %vm217, %v1577, %v1655
      %v1724 = vsel %vm217, %v1582, %v1657
      %v1725 = vsel %vm217, %v1587, %v1659
      %v1726 = vsel %vm217, %v1592, %v1661
      %v1727 = vsel %vm217, %v1597, %v1663
      %vm1728 = vcmask 326656
      %1729 = vst.msk [vmem:[%s172] sm:$0xff] %vm1728, %v1696
      %1730 = vst.msk [vmem:[%s172 + $0x8] sm:$0xff] %vm1728, %v1697
      %1731 = vst.msk [vmem:[%s172 + $0x10] sm:$0xff] %vm1728, %v1698
      %1732 = vst.msk [vmem:[%s172 + $0x18] sm:$0xff] %vm1728, %v1699
      %1733 = vst.msk [vmem:[%s172 + $0x20] sm:$0xff] %vm1728, %v1700
      %1734 = vst.msk [vmem:[%s172 + $0x28] sm:$0xff] %vm1728, %v1701
      %1735 = vst.msk [vmem:[%s172 + $0x30] sm:$0xff] %vm1728, %v1702
      %1736 = vst.msk [vmem:[%s172 + $0x38] sm:$0xff] %vm1728, %v1703
      %1737 = vst.msk [vmem:[%s172 + $0x40] sm:$0xff] %vm1728, %v1704
      %1738 = vst.msk [vmem:[%s172 + $0x48] sm:$0xff] %vm1728, %v1705
      %1739 = vst.msk [vmem:[%s172 + $0x50] sm:$0xff] %vm1728, %v1706
      %1740 = vst.msk [vmem:[%s172 + $0x58] sm:$0xff] %vm1728, %v1707
      %1741 = vst.msk [vmem:[%s172 + $0x60] sm:$0xff] %vm1728, %v1708
      %1742 = vst.msk [vmem:[%s172 + $0x68] sm:$0xff] %vm1728, %v1709
      %1743 = vst.msk [vmem:[%s172 + $0x70] sm:$0xff] %vm1728, %v1710
      %1744 = vst.msk [vmem:[%s172 + $0x78] sm:$0xff] %vm1728, %v1711
      %1745 = vst.msk [vmem:[%s172 + $0x80] sm:$0xff] %vm1728, %v1712
      %1746 = vst.msk [vmem:[%s172 + $0x88] sm:$0xff] %vm1728, %v1713
      %1747 = vst.msk [vmem:[%s172 + $0x90] sm:$0xff] %vm1728, %v1714
      %1748 = vst.msk [vmem:[%s172 + $0x98] sm:$0xff] %vm1728, %v1715
      %1749 = vst.msk [vmem:[%s172 + $0xa0] sm:$0xff] %vm1728, %v1716
      %1750 = vst.msk [vmem:[%s172 + $0xa8] sm:$0xff] %vm1728, %v1717
      %1751 = vst.msk [vmem:[%s172 + $0xb0] sm:$0xff] %vm1728, %v1718
      %1752 = vst.msk [vmem:[%s172 + $0xb8] sm:$0xff] %vm1728, %v1719
      %1753 = vst.msk [vmem:[%s172 + $0xc0] sm:$0xff] %vm1728, %v1720
      %1754 = vst.msk [vmem:[%s172 + $0xc8] sm:$0xff] %vm1728, %v1721
      %1755 = vst.msk [vmem:[%s172 + $0xd0] sm:$0xff] %vm1728, %v1722
      %1756 = vst.msk [vmem:[%s172 + $0xd8] sm:$0xff] %vm1728, %v1723
      %1757 = vst.msk [vmem:[%s172 + $0xe0] sm:$0xff] %vm1728, %v1724
      %1758 = vst.msk [vmem:[%s172 + $0xe8] sm:$0xff] %vm1728, %v1725
      %1759 = vst.msk [vmem:[%s172 + $0xf0] sm:$0xff] %vm1728, %v1726
      %1760 = vst.msk [vmem:[%s172 + $0xf8] sm:$0xff] %vm1728, %v1727
      %s1761 = smul.u32 32, %s14
      %p1762 = scmp.lt.s32.totalorder %s1761, 63
      %s1763 = scalar_select %p1762, %s1761, 63
      %s1764 = smul.addr %s1763, 8
      %s1765 = scalar_lea.vmem %s3, %s1764
      // Predicated region
      $region33: #{tpu_custom_call.1} parent=31 // pred_check
        %p1766 = pneg %p100
      $region34: #{tpu_custom_call.1} parent=31 // pred_check_branch
        %1768 = sbr.rel (%p1766) target = $region36
      $region35: #{tpu_custom_call.1} parent=31 // pred_region
        %s1769 = smul.u32 32, %s14
      $region36: #{tpu_custom_call.1} parent=31 // pred_fallthru
        _
    $region32: #{tpu_custom_call.1} parent=5 // pred_fallthru
      _
    %p1770 = scmp.le.s32.totalorder 2, %s9
    // Predicated region
    $region37: #{tpu_custom_call.1} parent=5 // pred_check
      %p1771 = pneg %p1770
    $region38: #{tpu_custom_call.1} parent=5 // pred_check_branch
      %1773 = sbr.rel (%p1771) target = $region40
    $region39: #{tpu_custom_call.1} parent=5 // pred_region
      %s1774 = ssub.s32 %s9, 2
      // Predicated region
      $region41: #{tpu_custom_call.1} parent=39 // pred_check
        %p1775 = pneg %p106
      $region42: #{tpu_custom_call.1} parent=39 // pred_check_branch
        %1777 = sbr.rel (%p1775) target = $region44
      $region43: #{tpu_custom_call.1} parent=39 // pred_region
        %s1778 = smul.u32 32, %s15
        %p1779 = scmp.lt.s32.totalorder %s1778, 63
        %s1780 = scalar_select %p1779, %s1778, 63
        %s1781 = smul.addr %s1780, 8
        %s1782 = scalar_lea.vmem %s3, %s1781
      $region44: #{tpu_custom_call.1} parent=39 // pred_fallthru
        _
    $region40: #{tpu_custom_call.1} parent=5 // pred_fallthru
      _
  $region6: #{tpu_custom_call.1} parent=0 // loop_footer
    %s13 = sadd.s32 1, %s9
  $region7: #{tpu_custom_call.1} parent=0 // loop_footer_branch
    %8 = sbr.rel target = $region3
  $region8: #{tpu_custom_call.1} parent=0 // loop_exit
    _

</llo_original>
